<compile_context>
chip_gen: v5e
topology: v5e:2x2
jax: 0.10.0
libtpu: 0.0.40
codegen_flags: <defaults>
</compile_context>

<pallas_src>
import math

import jax
import jax.numpy as jnp
from jax.experimental import pallas as pl
from jax.experimental.pallas import tpu as pltpu

_LOG_EPS = math.log(1e-4)
_LOG_1M_EPS = math.log(1.0 - 1e-4)


# ----------------------------------------------------------------------------- kernel
def _ctdet_stack_kernel(hm_logit_ref, hm_gt_ref, wh_feat_ref, reg_feat_ref,
                        ind_ref, mask_ref, wh_tgt_ref, reg_tgt_ref,
                        out_ref, npos_ref, loss_ref, rpart_ref):
    f32 = jnp.float32
    hw_i = pl.program_id(0)
    r_i = pl.program_id(1)
    n_r = pl.num_programs(1)

    tile_r, tile_hw = hm_logit_ref.shape
    fold_rows = npos_ref.shape[0]
    groups = tile_r // fold_rows

    # ---------------- focal-loss partials on this heat-map tile (every grid step) -----
    x = hm_logit_ref[...].astype(f32)            # upcast after the (possibly bf16) load
    gt = hm_gt_ref[...].astype(f32)

    # One shared softplus feeds log(sigmoid) and log(1 - sigmoid); the _sigmoid 1e-4
    # clamp is applied in log space (monotone -> exactly equivalent).
    sp = jnp.maximum(x, 0.0) + jnp.log(1.0 + jnp.exp(-jnp.abs(x)))   # softplus(x)
    log_p = jnp.clip(x - sp, _LOG_EPS, _LOG_1M_EPS)     # log(clamped sigmoid(x))
    log_1mp = jnp.clip(-sp, _LOG_EPS, _LOG_1M_EPS)      # log(clamped 1 - sigmoid(x))
    p = jnp.exp(log_p)
    one_m_p = 1.0 - p

    is_pos = gt == 1.0
    one_m_gt = 1.0 - gt
    sq = one_m_gt * one_m_gt
    neg_w = sq * sq                               # (1 - gt)^4 as square-of-square
    pos_branch = log_p * one_m_p * one_m_p
    neg_branch = log_1mp * (p * p) * neg_w
    # Fused select; inner select reproduces torch's (gt < 1) negative mask exactly.
    loss_elem = jnp.where(is_pos, pos_branch, jnp.where(gt < 1.0, neg_branch, 0.0))
    pos_elem = is_pos.astype(f32)

    if groups > 1:  # VALU-only sublane-group fold into the (fold_rows, tile_hw) acc
        loss_fold = loss_elem.reshape(groups, fold_rows, tile_hw).sum(axis=0)
        pos_fold = pos_elem.reshape(groups, fold_rows, tile_hw).sum(axis=0)
    else:
        loss_fold = loss_elem
        pos_fold = pos_elem

    @pl.when(r_i == 0)
    def _init_acc():
        npos_ref[...] = pos_fold
        loss_ref[...] = loss_fold

    @pl.when(r_i > 0)
    def _acc():
        npos_ref[...] += pos_fold
        loss_ref[...] += loss_fold

    # ---------------- RegL1 heads: one-hot MXU gather, once per HW tile ---------------
    @pl.when(r_i == 0)
    def _regression():
        ind = ind_ref[...]                        # (B, K) int32
        mask = mask_ref[...]                      # (B, K) f32
        b, k = ind.shape
        local = ind - hw_i * tile_hw              # index within this HW tile
        in_tile = jnp.logical_and(local >= 0, local < tile_hw).astype(f32)
        lane_t = jax.lax.broadcasted_iota(jnp.int32, (b, k, tile_hw), 2)
        onehot = (lane_t == local[:, :, None]).astype(f32)   # zero rows for out-of-tile k
        wh = wh_feat_ref[...].astype(f32)         # (B, 2, tile_hw)
        rg = reg_feat_ref[...].astype(f32)
        # HIGHEST keeps the gather exact in f32 (one-hot is exact 0/1).
        wh_pred = jnp.einsum('bct,bkt->bck', wh, onehot,
                             precision=jax.lax.Precision.HIGHEST,
                             preferred_element_type=f32)     # (B, 2, K)
        rg_pred = jnp.einsum('bct,bkt->bck', rg, onehot,
                             precision=jax.lax.Precision.HIGHEST,
                             preferred_element_type=f32)
        m = (mask * in_tile)[:, None, :]          # (B, 1, K): reg_mask AND in-this-tile
        wh_num = jnp.sum(jnp.abs(wh_pred * m - wh_tgt_ref[...] * m))
        off_num = jnp.sum(jnp.abs(rg_pred * m - reg_tgt_ref[...] * m))
        lane = jax.lax.broadcasted_iota(jnp.int32, (8, 128), 1)
        rpart_ref[...] = jnp.where(lane == 2, wh_num,
                                   jnp.where(lane == 3, off_num, 0.0))

    # ---------------- emit this HW tile's partial row on its last row step ------------
    @pl.when(r_i == n_r - 1)
    def _emit():
        npos = jnp.sum(npos_ref[...])             # single XLU reduce per HW tile
        lsum = jnp.sum(loss_ref[...])
        lane = jax.lax.broadcasted_iota(jnp.int32, (8, 128), 1)
        row = jnp.where(lane == 0, npos, jnp.where(lane == 1, lsum, 0.0)) + rpart_ref[...]
        out_ref[...] = row[None, :, :]            # lane-dense (1, 8, 128) partial


# ----------------------------------------------------------------------------- tiling
_HW_CANDS = (2048, 1024, 512, 256, 128)
_R_CANDS = (512, 256, 128, 64, 32, 16, 8)
_STREAM_BUDGET = 20 << 20     # bytes for the double-buffered heat-map streams
_ONEHOT_BUDGET = 8 << 20      # bytes for the per-tile (B, K, tile_hw) one-hot temp


def _divisor_tile(n, cap, align):
    """Largest divisor of n that is <= cap and a multiple of align (fallback: n itself)."""
    best = 0
    d = align
    while d <= min(n, cap):
        if n % d == 0:
            best = d
        d += align
    return best if best > 0 else n


def _select_tiles(rc, hw, b, k, hm_bytes, gt_bytes, tile_hw, tile_r):
    # sub-lane alignment for the streamed heat-map tiles depends on their packing
    sub_align = {4: 8, 2: 16, 1: 32}.get(min(hm_bytes, gt_bytes), 8)
    if tile_hw is None:
        tile_hw = 0
        for c in _HW_CANDS:
            if c <= hw and hw % c == 0 and b * k * c * 4 <= _ONEHOT_BUDGET:
                tile_hw = c
                break
        if tile_hw == 0:
            tile_hw = _divisor_tile(hw, max(_HW_CANDS), 128)
    if tile_r is None:
        per_row = 2 * tile_hw * (hm_bytes + gt_bytes)      # both streams, double-buffered
        max_r = max(sub_align, _STREAM_BUDGET // per_row)
        tile_r = 0
        for c in _R_CANDS:
            if c % sub_align == 0 and c <= max_r and c <= rc and rc % c == 0:
                tile_r = c
                break
        if tile_r == 0:
            tile_r = _divisor_tile(rc, max_r, sub_align)
    return tile_hw, tile_r


# ----------------------------------------------------------------------------- pallas_call
def _call_stack_kernel(hm_logits, hm_gt, wh_feat, reg_feat, ind, mask, wh_tgt, reg_tgt,
                       *, tile_hw=None, tile_r=None):
    RC, HW = hm_logits.shape
    B, K = ind.shape
    hm_bytes = jnp.dtype(hm_logits.dtype).itemsize
    gt_bytes = jnp.dtype(hm_gt.dtype).itemsize
    feat_bytes = max(jnp.dtype(wh_feat.dtype).itemsize, jnp.dtype(reg_feat.dtype).itemsize)

    tile_hw, tile_r = _select_tiles(RC, HW, B, K, hm_bytes, gt_bytes, tile_hw, tile_r)
    assert HW % tile_hw == 0 and RC % tile_r == 0, (tile_hw, tile_r, HW, RC)
    g_hw = HW // tile_hw
    g_r = RC // tile_r
    fold_rows = 8 if tile_r % 8 == 0 else tile_r

    # VMEM estimate: double-buffered streams + residents + scratch + one-hot temp.
    est = (2 * tile_r * tile_hw * (hm_bytes + gt_bytes)
           + 2 * 2 * B * 2 * tile_hw * feat_bytes
           + 4 * B * K * 4 + 4 * B * 2 * K * 4
           + 2 * fold_rows * tile_hw * 4
           + B * K * tile_hw * 4
           + 4 * 8 * 128 * 4)
    vmem_limit = int(min(max(2 * est + (4 << 20), 32 << 20), 56 << 20))

    return pl.pallas_call(
        _ctdet_stack_kernel,
        out_shape=jax.ShapeDtypeStruct((g_hw, 8, 128), jnp.float32),
        grid_spec=pltpu.PrefetchScalarGridSpec(
            num_scalar_prefetch=0,
            # hw tiles (parallel, splittable across v7x's 2 TCs) x heat-map row tiles
            grid=(g_hw, g_r),
            in_specs=[
                pl.BlockSpec((tile_r, tile_hw), lambda hw, r: (r, hw)),     # hm logits
                pl.BlockSpec((tile_r, tile_hw), lambda hw, r: (r, hw)),     # hm gt
                pl.BlockSpec((B, 2, tile_hw), lambda hw, r: (0, 0, hw)),    # wh feats
                pl.BlockSpec((B, 2, tile_hw), lambda hw, r: (0, 0, hw)),    # reg feats
                pl.BlockSpec((B, K), lambda hw, r: (0, 0)),                 # ind (resident)
                pl.BlockSpec((B, K), lambda hw, r: (0, 0)),                 # reg_mask
                pl.BlockSpec((B, 2, K), lambda hw, r: (0, 0, 0)),           # wh targets
                pl.BlockSpec((B, 2, K), lambda hw, r: (0, 0, 0)),           # reg targets
            ],
            out_specs=pl.BlockSpec((1, 8, 128), lambda hw, r: (hw, 0, 0)),
            scratch_shapes=[
                pltpu.VMEM((fold_rows, tile_hw), jnp.float32),   # num_pos partial (vector)
                pltpu.VMEM((fold_rows, tile_hw), jnp.float32),   # focal-loss partial (vector)
                pltpu.VMEM((8, 128), jnp.float32),               # [_, _, wh_num, off_num]
            ],
        ),
        compiler_params=pltpu.CompilerParams(
            dimension_semantics=("parallel", "arbitrary"),
            vmem_limit_bytes=vmem_limit),
    )(hm_logits, hm_gt, wh_feat, reg_feat, ind, mask, wh_tgt, reg_tgt)


# ----------------------------------------------------------------------------- wrapper
def ctdet_loss(outputs, batch, opt, *, tile_hw=None, tile_r=None):
    """Mirrors CtdetLoss.forward. `outputs` is a list of dicts (per stack) with NCHW maps."""
    B, C, H, W = batch['hm'].shape
    HW = H * W
    # Streamed maps keep their HBM dtype (bf16 halves the dominant heat-map traffic);
    # the kernel upcasts each tile to f32 after the VMEM load.
    hm_gt = batch['hm'].reshape(B * C, HW)
    ind = batch['ind'].astype(jnp.int32)                                    # (B, K)
    mask = batch['reg_mask'].astype(jnp.float32)                            # (B, K)
    wh_tgt = jnp.transpose(batch['wh'], (0, 2, 1)).astype(jnp.float32)      # (B, 2, K)
    reg_tgt = jnp.transpose(batch['reg'], (0, 2, 1)).astype(jnp.float32)    # (B, 2, K)
    den = 2.0 * jnp.sum(mask) + 1e-4      # expanded-mask sum per 2-channel head

    S = opt['num_stacks']
    hm_loss = jnp.float32(0.0)
    wh_loss = jnp.float32(0.0)
    off_loss = jnp.float32(0.0)
    # TODO(synk): for num_stacks > 1 add a stack grid axis so the gt heat-map tile stays
    #             resident in VMEM across stacks instead of being re-streamed per call.
    for s in range(S):
        out = outputs[s]
        hm_logits = out['hm'].reshape(B * C, HW)
        wh_feat = out['wh'].reshape(B, 2, HW)
        reg_feat = out['reg'].reshape(B, 2, HW)
        res = _call_stack_kernel(hm_logits, hm_gt, wh_feat, reg_feat, ind, mask,
                                 wh_tgt, reg_tgt, tile_hw=tile_hw, tile_r=tile_r)
        totals = jnp.sum(res[:, 0, :], axis=0)           # combine per-HW-tile partials
        num_pos, lsum = totals[0], totals[1]
        wh_num, off_num = totals[2], totals[3]
        # The positive sum is exactly 0 when num_pos == 0, so max(num_pos, 1) reproduces
        # torch's num_pos == 0 special case exactly.
        hm_loss = hm_loss + (-lsum / jnp.maximum(num_pos, 1.0)) / S
        if opt['wh_weight'] > 0:
            wh_loss = wh_loss + (wh_num / den) / S
        if opt['reg_offset'] and opt['off_weight'] > 0:
            off_loss = off_loss + (off_num / den) / S

    loss = (opt['hm_weight'] * hm_loss
            + opt['wh_weight'] * wh_loss
            + opt['off_weight'] * off_loss)
    loss_stats = {'loss': loss, 'hm_loss': hm_loss, 'wh_loss': wh_loss, 'off_loss': off_loss}
    return loss, loss_stats


# ----------------------------------------------------------------------------- pure-JAX reference
def _ref_ctdet_loss(outputs, batch, opt):
    def focal(pred, gt):
        pos = (gt == 1.0).astype(jnp.float32)
        neg = (gt < 1.0).astype(jnp.float32)
        pos_loss = jnp.log(pred) * (1 - pred) ** 2 * pos
        neg_loss = jnp.log(1 - pred) * pred ** 2 * (1 - gt) ** 4 * neg
        num_pos = pos.sum()
        return jnp.where(num_pos == 0.0, -neg_loss.sum(),
                         -(pos_loss.sum() + neg_loss.sum()) / jnp.maximum(num_pos, 1.0))

    def reg_l1(feat, mask, ind, tgt):
        B, C, H, W = feat.shape
        fp = feat.transpose(0, 2, 3, 1).reshape(B, H * W, C)
        pred = jnp.take_along_axis(fp, ind[:, :, None].astype(jnp.int32), axis=1)  # (B, K, C)
        m = mask[:, :, None].astype(jnp.float32) * jnp.ones_like(pred)
        return jnp.abs(pred * m - tgt * m).sum() / (m.sum() + 1e-4)

    S = opt['num_stacks']
    hm_l = wh_l = off_l = 0.0
    for s in range(S):
        o = outputs[s]
        pred_hm = jnp.clip(jax.nn.sigmoid(o['hm'].astype(jnp.float32)), 1e-4, 1 - 1e-4)
        hm_l = hm_l + focal(pred_hm, batch['hm'].astype(jnp.float32)) / S
        wh_l = wh_l + reg_l1(o['wh'], batch['reg_mask'], batch['ind'], batch['wh']) / S
        off_l = off_l + reg_l1(o['reg'], batch['reg_mask'], batch['ind'], batch['reg']) / S
    loss = opt['hm_weight'] * hm_l + opt['wh_weight'] * wh_l + opt['off_weight'] * off_l
    return loss, hm_l, wh_l, off_l


# ----------------------------------------------------------------------------- main
if __name__ == "__main__":
    opt = dict(num_stacks=1, hm_weight=1.0, wh_weight=0.1, off_weight=1.0, reg_offset=True)

    B, C, H, W, K = 2, 8, 32, 32, 8
    key = jax.random.PRNGKey(0)
    k1, k2, k3, k4, k5, k6, k7, k8 = jax.random.split(key, 8)

    # network outputs (logits / raw regressions), NCHW like PyTorch
    out_hm = jax.random.normal(k1, (B, C, H, W), jnp.float32)
    out_wh = jax.random.normal(k2, (B, 2, H, W), jnp.float32) * 2.0
    out_reg = jax.random.normal(k3, (B, 2, H, W), jnp.float32) * 0.5
    outputs = [{'hm': out_hm, 'wh': out_wh, 'reg': out_reg}]

    # ground-truth batch: heatmap in [0, 1) with some exact 1.0 peaks
    gt_hm = jax.random.uniform(k4, (B, C, H, W), jnp.float32, 0.0, 0.95)
    peak_b = jnp.array([0, 0, 1, 1])
    peak_c = jnp.array([0, 2, 1, 3])
    peak_y = jnp.array([3, 8, 5, 12])
    peak_x = jnp.array([4, 9, 6, 13])
    gt_hm = gt_hm.at[peak_b, peak_c, peak_y, peak_x].set(1.0)

    ind = jax.random.randint(k5, (B, K), 0, H * W, jnp.int32)
    reg_mask = (jax.random.uniform(k6, (B, K)) > 0.3).astype(jnp.float32)
    wh_tgt = jax.random.uniform(k7, (B, K, 2), jnp.float32, 0.0, 10.0)
    reg_tgt = jax.random.uniform(k8, (B, K, 2), jnp.float32, 0.0, 1.0)

    batch = {'hm': gt_hm, 'reg_mask': reg_mask, 'ind': ind, 'wh': wh_tgt, 'reg': reg_tgt}

    # ---- f32 path; force a multi-tile grid (4 HW tiles x 2 row tiles) so the
    #      init / accumulate / emit and in-tile gather paths are all exercised. ----
    loss, stats = ctdet_loss(outputs, batch, opt, tile_hw=256, tile_r=8)
    loss = jax.block_until_ready(loss)
    stats = jax.block_until_ready(stats)

    ref_loss, ref_hm, ref_wh, ref_off = _ref_ctdet_loss(outputs, batch, opt)
    assert jnp.allclose(loss, ref_loss, rtol=1e-4, atol=1e-4), (loss, ref_loss)
    assert jnp.allclose(stats['hm_loss'], ref_hm, rtol=1e-4, atol=1e-4), (stats['hm_loss'], ref_hm)
    # the gather now runs at Precision.HIGHEST, so wh/off match the reference tightly
    assert jnp.allclose(stats['wh_loss'], ref_wh, rtol=1e-4, atol=1e-5), (stats['wh_loss'], ref_wh)
    assert jnp.allclose(stats['off_loss'], ref_off, rtol=1e-4, atol=1e-5), (stats['off_loss'], ref_off)

    # ---- bf16-streamed heat maps (halves the dominant HBM traffic); the kernel
    #      upcasts after the load, so compare against a reference on the upcast values. ----
    out_hm_b = out_hm.astype(jnp.bfloat16)
    gt_hm_b = gt_hm.astype(jnp.bfloat16)
    outputs_b = [{'hm': out_hm_b, 'wh': out_wh, 'reg': out_reg}]
    batch_b = dict(batch, hm=gt_hm_b)
    loss_b, stats_b = ctdet_loss(outputs_b, batch_b, opt, tile_hw=256)
    loss_b = jax.block_until_ready(loss_b)

    outputs_b32 = [{'hm': out_hm_b.astype(jnp.float32), 'wh': out_wh, 'reg': out_reg}]
    batch_b32 = dict(batch, hm=gt_hm_b.astype(jnp.float32))
    ref_loss_b, ref_hm_b, _, _ = _ref_ctdet_loss(outputs_b32, batch_b32, opt)
    assert jnp.allclose(loss_b, ref_loss_b, rtol=1e-4, atol=1e-4), (loss_b, ref_loss_b)
    assert jnp.allclose(stats_b['hm_loss'], ref_hm_b, rtol=1e-4, atol=1e-4)

    print("KERNEL_OK")
</pallas_src>

<mosaic_0001>
module attributes {stable_mosaic.version = 11 : i64} {
  func.func @_ctdet_stack_kernel(%arg0: i32, %arg1: i32, %arg2: memref<8x256xf32, #tpu.memory_space<vmem>>, %arg3: memref<8x256xf32, #tpu.memory_space<vmem>>, %arg4: memref<2x2x256xf32, #tpu.memory_space<vmem>>, %arg5: memref<2x2x256xf32, #tpu.memory_space<vmem>>, %arg6: memref<2x8xi32, #tpu.memory_space<vmem>>, %arg7: memref<2x8xf32, #tpu.memory_space<vmem>>, %arg8: memref<2x2x8xf32, #tpu.memory_space<vmem>>, %arg9: memref<2x2x8xf32, #tpu.memory_space<vmem>>, %arg10: memref<1x8x128xf32, #tpu.memory_space<vmem>>, %arg11: memref<8x256xf32, #tpu.memory_space<vmem>>, %arg12: memref<8x256xf32, #tpu.memory_space<vmem>>, %arg13: memref<8x128xf32, #tpu.memory_space<vmem>>) attributes {dimension_semantics = [#tpu.dimension_semantics<parallel>, #tpu.dimension_semantics<arbitrary>], iteration_bounds = array<i64: 4, 2>, scalar_prefetch = 0 : i64, scratch_operands = 3 : i64, tpu.core_type = #tpu.core_type<tc>, window_params = [{transform_indices = @transform_0, window_bounds = array<i64: 8, 256>}, {transform_indices = @transform_1, window_bounds = array<i64: 8, 256>}, {transform_indices = @transform_2, window_bounds = array<i64: 2, 2, 256>}, {transform_indices = @transform_3, window_bounds = array<i64: 2, 2, 256>}, {pipeline_mode = #tpu.pipeline_mode<synchronous>, transform_indices = @transform_4, window_bounds = array<i64: 2, 8>}, {pipeline_mode = #tpu.pipeline_mode<synchronous>, transform_indices = @transform_5, window_bounds = array<i64: 2, 8>}, {pipeline_mode = #tpu.pipeline_mode<synchronous>, transform_indices = @transform_6, window_bounds = array<i64: 2, 2, 8>}, {pipeline_mode = #tpu.pipeline_mode<synchronous>, transform_indices = @transform_7, window_bounds = array<i64: 2, 2, 8>}, {transform_indices = @transform_8, window_bounds = array<i64: 1, 8, 128>}]} {
    %c0 = arith.constant 0 : index
    %c0_0 = arith.constant 0 : index
    %0 = vector.load %arg2[%c0, %c0_0] : memref<8x256xf32, #tpu.memory_space<vmem>>, vector<8x256xf32>
    %c0_1 = arith.constant 0 : index
    %c0_2 = arith.constant 0 : index
    %1 = vector.load %arg3[%c0_1, %c0_2] : memref<8x256xf32, #tpu.memory_space<vmem>>, vector<8x256xf32>
    %cst = arith.constant 0.000000e+00 : f32
    %2 = vector.broadcast %cst : f32 to vector<8x256xf32>
    %3 = arith.maximumf %0, %2 : vector<8x256xf32>
    %4 = math.absf %0 : vector<8x256xf32>
    %cst_3 = arith.constant 0.000000e+00 : f32
    %5 = vector.broadcast %cst_3 : f32 to vector<8x256xf32>
    %6 = arith.subf %5, %4 : vector<8x256xf32>
    %7 = math.exp %6 : vector<8x256xf32>
    %cst_4 = arith.constant 1.000000e+00 : f32
    %8 = vector.broadcast %cst_4 : f32 to vector<8x256xf32>
    %9 = arith.addf %8, %7 : vector<8x256xf32>
    %10 = math.log %9 : vector<8x256xf32>
    %11 = arith.addf %3, %10 : vector<8x256xf32>
    %12 = arith.subf %0, %11 : vector<8x256xf32>
    %cst_5 = arith.constant -9.21034049 : f32
    %cst_6 = arith.constant -1.000050e-04 : f32
    %13 = vector.broadcast %cst_5 : f32 to vector<8x256xf32>
    %14 = arith.maximumf %13, %12 : vector<8x256xf32>
    %15 = vector.broadcast %cst_6 : f32 to vector<8x256xf32>
    %16 = arith.minimumf %15, %14 : vector<8x256xf32>
    %cst_7 = arith.constant 0.000000e+00 : f32
    %17 = vector.broadcast %cst_7 : f32 to vector<8x256xf32>
    %18 = arith.subf %17, %11 : vector<8x256xf32>
    %cst_8 = arith.constant -9.21034049 : f32
    %cst_9 = arith.constant -1.000050e-04 : f32
    %19 = vector.broadcast %cst_8 : f32 to vector<8x256xf32>
    %20 = arith.maximumf %19, %18 : vector<8x256xf32>
    %21 = vector.broadcast %cst_9 : f32 to vector<8x256xf32>
    %22 = arith.minimumf %21, %20 : vector<8x256xf32>
    %23 = math.exp %16 : vector<8x256xf32>
    %cst_10 = arith.constant 1.000000e+00 : f32
    %24 = vector.broadcast %cst_10 : f32 to vector<8x256xf32>
    %25 = arith.subf %24, %23 : vector<8x256xf32>
    %cst_11 = arith.constant 1.000000e+00 : f32
    %26 = vector.broadcast %cst_11 : f32 to vector<8x256xf32>
    %27 = arith.cmpf oeq, %1, %26 : vector<8x256xf32>
    %cst_12 = arith.constant 1.000000e+00 : f32
    %28 = vector.broadcast %cst_12 : f32 to vector<8x256xf32>
    %29 = arith.subf %28, %1 : vector<8x256xf32>
    %30 = arith.mulf %29, %29 : vector<8x256xf32>
    %31 = arith.mulf %30, %30 : vector<8x256xf32>
    %32 = arith.mulf %16, %25 : vector<8x256xf32>
    %33 = arith.mulf %32, %25 : vector<8x256xf32>
    %34 = arith.mulf %23, %23 : vector<8x256xf32>
    %35 = arith.mulf %22, %34 : vector<8x256xf32>
    %36 = arith.mulf %35, %31 : vector<8x256xf32>
    %cst_13 = arith.constant 1.000000e+00 : f32
    %37 = vector.broadcast %cst_13 : f32 to vector<8x256xf32>
    %38 = arith.cmpf olt, %1, %37 : vector<8x256xf32>
    %cst_14 = arith.constant 0.000000e+00 : f32
    %39 = vector.broadcast %cst_14 : f32 to vector<8x256xf32>
    %40 = arith.select %38, %36, %39 : vector<8x256xi1>, vector<8x256xf32>
    %41 = arith.select %27, %33, %40 : vector<8x256xi1>, vector<8x256xf32>
    %42 = arith.extui %27 : vector<8x256xi1> to vector<8x256xi32>
    %43 = arith.sitofp %42 : vector<8x256xi32> to vector<8x256xf32>
    %c0_i32 = arith.constant 0 : i32
    %44 = arith.cmpi eq, %arg1, %c0_i32 : i32
    %45 = arith.extui %44 : i1 to i32
    %c0_i32_15 = arith.constant 0 : i32
    %46 = arith.cmpi ne, %45, %c0_i32_15 : i32
    scf.if %46 {
      %c0_21 = arith.constant 0 : index
      %c0_22 = arith.constant 0 : index
      %56 = vector.load %arg11[%c0_21, %c0_22] : memref<8x256xf32, #tpu.memory_space<vmem>>, vector<8x256xf32>
      tpu.vector_store %arg11[%c0_21, %c0_22], %43 {strides = array<i32>} : memref<8x256xf32, #tpu.memory_space<vmem>>, vector<8x256xf32>,
      %c0_23 = arith.constant 0 : index
      %c0_24 = arith.constant 0 : index
      %57 = vector.load %arg12[%c0_23, %c0_24] : memref<8x256xf32, #tpu.memory_space<vmem>>, vector<8x256xf32>
      tpu.vector_store %arg12[%c0_23, %c0_24], %41 {strides = array<i32>} : memref<8x256xf32, #tpu.memory_space<vmem>>, vector<8x256xf32>,
    } else {
    }
    %c0_i32_16 = arith.constant 0 : i32
    %47 = arith.cmpi sgt, %arg1, %c0_i32_16 : i32
    %48 = arith.extui %47 : i1 to i32
    %c0_i32_17 = arith.constant 0 : i32
    %49 = arith.cmpi ne, %48, %c0_i32_17 : i32
    scf.if %49 {
      %c0_21 = arith.constant 0 : index
      %c0_22 = arith.constant 0 : index
      %56 = vector.load %arg11[%c0_21, %c0_22] : memref<8x256xf32, #tpu.memory_space<vmem>>, vector<8x256xf32>
      %57 = arith.addf %56, %43 : vector<8x256xf32>
      %c0_23 = arith.constant 0 : index
      %c0_24 = arith.constant 0 : index
      %58 = vector.load %arg11[%c0_23, %c0_24] : memref<8x256xf32, #tpu.memory_space<vmem>>, vector<8x256xf32>
      tpu.vector_store %arg11[%c0_23, %c0_24], %57 {strides = array<i32>} : memref<8x256xf32, #tpu.memory_space<vmem>>, vector<8x256xf32>,
      %c0_25 = arith.constant 0 : index
      %c0_26 = arith.constant 0 : index
      %59 = vector.load %arg12[%c0_25, %c0_26] : memref<8x256xf32, #tpu.memory_space<vmem>>, vector<8x256xf32>
      %60 = arith.addf %59, %41 : vector<8x256xf32>
      %c0_27 = arith.constant 0 : index
      %c0_28 = arith.constant 0 : index
      %61 = vector.load %arg12[%c0_27, %c0_28] : memref<8x256xf32, #tpu.memory_space<vmem>>, vector<8x256xf32>
      tpu.vector_store %arg12[%c0_27, %c0_28], %60 {strides = array<i32>} : memref<8x256xf32, #tpu.memory_space<vmem>>, vector<8x256xf32>,
    } else {
    }
    %c0_i32_18 = arith.constant 0 : i32
    %50 = arith.cmpi eq, %arg1, %c0_i32_18 : i32
    %51 = arith.extui %50 : i1 to i32
    %c0_i32_19 = arith.constant 0 : i32
    %52 = arith.cmpi ne, %51, %c0_i32_19 : i32
    scf.if %52 {
      %c0_21 = arith.constant 0 : index
      %c0_22 = arith.constant 0 : index
      %56 = vector.load %arg6[%c0_21, %c0_22] : memref<2x8xi32, #tpu.memory_space<vmem>>, vector<2x8xi32>
      %c0_23 = arith.constant 0 : index
      %c0_24 = arith.constant 0 : index
      %57 = vector.load %arg7[%c0_23, %c0_24] : memref<2x8xf32, #tpu.memory_space<vmem>>, vector<2x8xf32>
      %c256_i32 = arith.constant 256 : i32
      %58 = arith.muli %arg0, %c256_i32 : i32
      %59 = vector.broadcast %58 : i32 to vector<2x8xi32>
      %60 = arith.subi %56, %59 : vector<2x8xi32>
      %c0_i32_25 = arith.constant 0 : i32
      %61 = vector.broadcast %c0_i32_25 : i32 to vector<2x8xi32>
      %62 = arith.cmpi sge, %60, %61 : vector<2x8xi32>
      %c256_i32_26 = arith.constant 256 : i32
      %63 = vector.broadcast %c256_i32_26 : i32 to vector<2x8xi32>
      %64 = arith.cmpi slt, %60, %63 : vector<2x8xi32>
      %65 = arith.andi %62, %64 : vector<2x8xi1>
      %66 = arith.extui %65 : vector<2x8xi1> to vector<2x8xi32>
      %67 = arith.sitofp %66 : vector<2x8xi32> to vector<2x8xf32>
      %68 = tpu.iota {dimensions = array<i32: 2>} : vector<2x8x256xi32>
      %69 = vector.shape_cast %60 : vector<2x8xi32> to vector<2x8x1xi32>
      %70 = vector.broadcast %69 : vector<2x8x1xi32> to vector<2x8x256xi32>
      %71 = arith.cmpi eq, %68, %70 : vector<2x8x256xi32>
      %72 = arith.extui %71 : vector<2x8x256xi1> to vector<2x8x256xi32>
      %73 = arith.sitofp %72 : vector<2x8x256xi32> to vector<2x8x256xf32>
      %c0_27 = arith.constant 0 : index
      %c0_28 = arith.constant 0 : index
      %c0_29 = arith.constant 0 : index
      %74 = vector.load %arg4[%c0_27, %c0_28, %c0_29] : memref<2x2x256xf32, #tpu.memory_space<vmem>>, vector<2x2x256xf32>
      %c0_30 = arith.constant 0 : index
      %c0_31 = arith.constant 0 : index
      %c0_32 = arith.constant 0 : index
      %75 = vector.load %arg5[%c0_30, %c0_31, %c0_32] : memref<2x2x256xf32, #tpu.memory_space<vmem>>, vector<2x2x256xf32>
      "tpu.trace_start"() <{level = 10 : i32, message = "bct,bkt->bck"}> : () -> ()
      %cst_33 = arith.constant dense<0.000000e+00> : vector<2x2x8xf32>
      %76 = tpu.matmul %74, %73, %cst_33 {dimension_numbers = #tpu.dot_dimension_numbers<[2], [2], [1], [1], [0, 0, 0, 1, 1, 1], [0], [0]>, precision = #tpu.contract_precision<fp32>} : vector<2x2x256xf32>, vector<2x8x256xf32>, vector<2x2x8xf32> -> vector<2x2x8xf32>
      %cst_34 = arith.constant dense<0.000000e+00> : vector<2x2x8xf32>
      %77 = tpu.matmul %75, %73, %cst_34 {dimension_numbers = #tpu.dot_dimension_numbers<[2], [2], [1], [1], [0, 0, 0, 1, 1, 1], [0], [0]>, precision = #tpu.contract_precision<fp32>} : vector<2x2x256xf32>, vector<2x8x256xf32>, vector<2x2x8xf32> -> vector<2x2x8xf32>
      "tpu.trace_stop"() : () -> ()
      %78 = arith.mulf %57, %67 : vector<2x8xf32>
      %79 = vector.shape_cast %78 : vector<2x8xf32> to vector<2x1x8xf32>
      %80 = vector.broadcast %79 : vector<2x1x8xf32> to vector<2x2x8xf32>
      %81 = arith.mulf %76, %80 : vector<2x2x8xf32>
      %c0_35 = arith.constant 0 : index
      %c0_36 = arith.constant 0 : index
      %c0_37 = arith.constant 0 : index
      %82 = vector.load %arg8[%c0_35, %c0_36, %c0_37] : memref<2x2x8xf32, #tpu.memory_space<vmem>>, vector<2x2x8xf32>
      %83 = vector.broadcast %79 : vector<2x1x8xf32> to vector<2x2x8xf32>
      %84 = arith.mulf %82, %83 : vector<2x2x8xf32>
      %85 = arith.subf %81, %84 : vector<2x2x8xf32>
      %86 = math.absf %85 : vector<2x2x8xf32>
      %87 = vector.shape_cast %86 : vector<2x2x8xf32> to vector<1x2x2x8xf32>
      %cst_38 = arith.constant dense<0.000000e+00> : vector<1xf32>
      %88 = vector.multi_reduction <add>, %87, %cst_38 [1, 2, 3] : vector<1x2x2x8xf32> to vector<1xf32>
      %89 = vector.shape_cast %88 : vector<1xf32> to vector<1x1x1x1xf32>
      %90 = vector.extract %89[0, 0, 0, 0] : f32 from vector<1x1x1x1xf32>
      %91 = vector.broadcast %79 : vector<2x1x8xf32> to vector<2x2x8xf32>
      %92 = arith.mulf %77, %91 : vector<2x2x8xf32>
      %c0_39 = arith.constant 0 : index
      %c0_40 = arith.constant 0 : index
      %c0_41 = arith.constant 0 : index
      %93 = vector.load %arg9[%c0_39, %c0_40, %c0_41] : memref<2x2x8xf32, #tpu.memory_space<vmem>>, vector<2x2x8xf32>
      %94 = vector.broadcast %79 : vector<2x1x8xf32> to vector<2x2x8xf32>
      %95 = arith.mulf %93, %94 : vector<2x2x8xf32>
      %96 = arith.subf %92, %95 : vector<2x2x8xf32>
      %97 = math.absf %96 : vector<2x2x8xf32>
      %98 = vector.shape_cast %97 : vector<2x2x8xf32> to vector<1x2x2x8xf32>
      %cst_42 = arith.constant dense<0.000000e+00> : vector<1xf32>
      %99 = vector.multi_reduction <add>, %98, %cst_42 [1, 2, 3] : vector<1x2x2x8xf32> to vector<1xf32>
      %100 = vector.shape_cast %99 : vector<1xf32> to vector<1x1x1x1xf32>
      %101 = vector.extract %100[0, 0, 0, 0] : f32 from vector<1x1x1x1xf32>
      %102 = tpu.iota {dimensions = array<i32: 1>} : vector<8x128xi32>
      %c2_i32 = arith.constant 2 : i32
      %103 = vector.broadcast %c2_i32 : i32 to vector<8x128xi32>
      %104 = arith.cmpi eq, %102, %103 : vector<8x128xi32>
      %c3_i32 = arith.constant 3 : i32
      %105 = vector.broadcast %c3_i32 : i32 to vector<8x128xi32>
      %106 = arith.cmpi eq, %102, %105 : vector<8x128xi32>
      %cst_43 = arith.constant 0.000000e+00 : f32
      %107 = vector.broadcast %101 : f32 to vector<8x128xf32>
      %108 = vector.broadcast %cst_43 : f32 to vector<8x128xf32>
      %109 = arith.select %106, %107, %108 : vector<8x128xi1>, vector<8x128xf32>
      %110 = vector.broadcast %90 : f32 to vector<8x128xf32>
      %111 = arith.select %104, %110, %109 : vector<8x128xi1>, vector<8x128xf32>
      %c0_44 = arith.constant 0 : index
      %c0_45 = arith.constant 0 : index
      %112 = vector.load %arg13[%c0_44, %c0_45] : memref<8x128xf32, #tpu.memory_space<vmem>>, vector<8x128xf32>
      tpu.vector_store %arg13[%c0_44, %c0_45], %111 {strides = array<i32>} : memref<8x128xf32, #tpu.memory_space<vmem>>, vector<8x128xf32>,
    } else {
    }
    %c1_i32 = arith.constant 1 : i32
    %53 = arith.cmpi eq, %arg1, %c1_i32 : i32
    %54 = arith.extui %53 : i1 to i32
    %c0_i32_20 = arith.constant 0 : i32
    %55 = arith.cmpi ne, %54, %c0_i32_20 : i32
    scf.if %55 {
      %c0_21 = arith.constant 0 : index
      %c0_22 = arith.constant 0 : index
      %56 = vector.load %arg11[%c0_21, %c0_22] : memref<8x256xf32, #tpu.memory_space<vmem>>, vector<8x256xf32>
      %57 = vector.shape_cast %56 : vector<8x256xf32> to vector<1x8x256xf32>
      %cst_23 = arith.constant dense<0.000000e+00> : vector<1xf32>
      %58 = vector.multi_reduction <add>, %57, %cst_23 [1, 2] : vector<1x8x256xf32> to vector<1xf32>
      %59 = vector.shape_cast %58 : vector<1xf32> to vector<1x1x1xf32>
      %60 = vector.extract %59[0, 0, 0] : f32 from vector<1x1x1xf32>
      %c0_24 = arith.constant 0 : index
      %c0_25 = arith.constant 0 : index
      %61 = vector.load %arg12[%c0_24, %c0_25] : memref<8x256xf32, #tpu.memory_space<vmem>>, vector<8x256xf32>
      %62 = vector.shape_cast %61 : vector<8x256xf32> to vector<1x8x256xf32>
      %cst_26 = arith.constant dense<0.000000e+00> : vector<1xf32>
      %63 = vector.multi_reduction <add>, %62, %cst_26 [1, 2] : vector<1x8x256xf32> to vector<1xf32>
      %64 = vector.shape_cast %63 : vector<1xf32> to vector<1x1x1xf32>
      %65 = vector.extract %64[0, 0, 0] : f32 from vector<1x1x1xf32>
      %66 = tpu.iota {dimensions = array<i32: 1>} : vector<8x128xi32>
      %c0_i32_27 = arith.constant 0 : i32
      %67 = vector.broadcast %c0_i32_27 : i32 to vector<8x128xi32>
      %68 = arith.cmpi eq, %66, %67 : vector<8x128xi32>
      %c1_i32_28 = arith.constant 1 : i32
      %69 = vector.broadcast %c1_i32_28 : i32 to vector<8x128xi32>
      %70 = arith.cmpi eq, %66, %69 : vector<8x128xi32>
      %cst_29 = arith.constant 0.000000e+00 : f32
      %71 = vector.broadcast %65 : f32 to vector<8x128xf32>
      %72 = vector.broadcast %cst_29 : f32 to vector<8x128xf32>
      %73 = arith.select %70, %71, %72 : vector<8x128xi1>, vector<8x128xf32>
      %74 = vector.broadcast %60 : f32 to vector<8x128xf32>
      %75 = arith.select %68, %74, %73 : vector<8x128xi1>, vector<8x128xf32>
      %c0_30 = arith.constant 0 : index
      %c0_31 = arith.constant 0 : index
      %76 = vector.load %arg13[%c0_30, %c0_31] : memref<8x128xf32, #tpu.memory_space<vmem>>, vector<8x128xf32>
      %77 = arith.addf %75, %76 : vector<8x128xf32>
      %78 = vector.shape_cast %77 : vector<8x128xf32> to vector<1x8x128xf32>
      %c0_32 = arith.constant 0 : index
      %c0_33 = arith.constant 0 : index
      %c0_34 = arith.constant 0 : index
      %79 = vector.load %arg10[%c0_32, %c0_33, %c0_34] : memref<1x8x128xf32, #tpu.memory_space<vmem>>, vector<1x8x128xf32>
      tpu.vector_store %arg10[%c0_32, %c0_33, %c0_34], %78 {strides = array<i32>} : memref<1x8x128xf32, #tpu.memory_space<vmem>>, vector<1x8x128xf32>,
    } else {
    }
    return
  }
  func.func @transform_0(%arg0: i32, %arg1: i32) -> (i32, i32) {
    %c0_i32 = arith.constant 0 : i32
    return %arg1, %arg0 : i32, i32
  }
  func.func @transform_1(%arg0: i32, %arg1: i32) -> (i32, i32) {
    %c0_i32 = arith.constant 0 : i32
    return %arg1, %arg0 : i32, i32
  }
  func.func @transform_2(%arg0: i32, %arg1: i32) -> (i32, i32, i32) {
    %c0_i32 = arith.constant 0 : i32
    %c0_i32_0 = arith.constant 0 : i32
    %c0_i32_1 = arith.constant 0 : i32
    return %c0_i32, %c0_i32_0, %arg0 : i32, i32, i32
  }
  func.func @transform_3(%arg0: i32, %arg1: i32) -> (i32, i32, i32) {
    %c0_i32 = arith.constant 0 : i32
    %c0_i32_0 = arith.constant 0 : i32
    %c0_i32_1 = arith.constant 0 : i32
    return %c0_i32, %c0_i32_0, %arg0 : i32, i32, i32
  }
  func.func @transform_4(%arg0: i32, %arg1: i32) -> (i32, i32) {
    %c0_i32 = arith.constant 0 : i32
    %c0_i32_0 = arith.constant 0 : i32
    %c0_i32_1 = arith.constant 0 : i32
    return %c0_i32, %c0_i32_0 : i32, i32
  }
  func.func @transform_5(%arg0: i32, %arg1: i32) -> (i32, i32) {
    %c0_i32 = arith.constant 0 : i32
    %c0_i32_0 = arith.constant 0 : i32
    %c0_i32_1 = arith.constant 0 : i32
    return %c0_i32, %c0_i32_0 : i32, i32
  }
  func.func @transform_6(%arg0: i32, %arg1: i32) -> (i32, i32, i32) {
    %c0_i32 = arith.constant 0 : i32
    %c0_i32_0 = arith.constant 0 : i32
    %c0_i32_1 = arith.constant 0 : i32
    %c0_i32_2 = arith.constant 0 : i32
    return %c0_i32, %c0_i32_0, %c0_i32_1 : i32, i32, i32
  }
  func.func @transform_7(%arg0: i32, %arg1: i32) -> (i32, i32, i32) {
    %c0_i32 = arith.constant 0 : i32
    %c0_i32_0 = arith.constant 0 : i32
    %c0_i32_1 = arith.constant 0 : i32
    %c0_i32_2 = arith.constant 0 : i32
    return %c0_i32, %c0_i32_0, %c0_i32_1 : i32, i32, i32
  }
  func.func @transform_8(%arg0: i32, %arg1: i32) -> (i32, i32, i32) {
    %c0_i32 = arith.constant 0 : i32
    %c0_i32_0 = arith.constant 0 : i32
    %c0_i32_1 = arith.constant 0 : i32
    return %arg0, %c0_i32, %c0_i32_0 : i32, i32, i32
  }
}

</mosaic_0001>

<llo_original>
// kernel: tpu_custom_call.1
$region0: #{tpu_custom_call.1}
  #allocation0 [shape = 'u32[]', space=smem, size = 0x4, offset = 0x4, fixed_abs, tag = 'smem constant byte address 0x4 - core index']
  #allocation1 [shape = 'u32[72,128]{1,0:T(1,128)}', space=vmem, size = 0x9000, scoped, tag = 'internal scratch']
  #allocation2 [shape = 'f32[8,256]{1,0:T(8,128)}', space=vmem, size = 0x2000, scoped, tag = 'scratch operand']
  #allocation3 [shape = 'f32[8,256]{1,0:T(8,128)}', space=vmem, size = 0x2000, scoped, tag = 'scratch operand']
  #allocation4 [shape = 'f32[8,128]{1,0:T(8,128)}', space=vmem, size = 0x1000, scoped, tag = 'scratch operand']
  %s0 = inlined_call_operand.hbm [shape: f32[16,1024], index: 0, kind: input, shape index: {}]
  %s1 = inlined_call_operand.hbm [shape: f32[16,1024], index: 1, kind: input, shape index: {}]
  %s2 = inlined_call_operand.hbm [shape: f32[2,2,1024], index: 2, kind: input, shape index: {}]
  %s3 = inlined_call_operand.hbm [shape: f32[2,2,1024], index: 3, kind: input, shape index: {}]
  %s4 = inlined_call_operand.hbm [shape: s32[2,8], index: 4, kind: input, shape index: {}]
  %s5 = inlined_call_operand.hbm [shape: f32[2,8], index: 5, kind: input, shape index: {}]
  %s6 = inlined_call_operand.vmem [shape: f32[2,2,8], index: 6, kind: input, shape index: {}]
  %s7 = inlined_call_operand.hbm [shape: f32[2,2,8], index: 7, kind: input, shape index: {}]
  %s8 = inlined_call_operand.hbm [shape: f32[4,8,128], index: 8, kind: output, shape index: {}]
  %s9 = sld [smem:[#allocation0]]
  $region109: #{tpu_custom_call.1} parent=0
    _
  %s11 = ssub.s32 1, %s9
  %s12 = scalar_select 0, %s11, %s9
  $region1: #{tpu_custom_call.1} parent=0
    #allocation5 [shape = 'u8[16384]{0}', space=vmem, size = 0x4000, scoped, tag = 'input window, operand 0']
    #allocation6 [shape = 's32[2]{0}', space=sflag, size = 0x8, scoped, tag = 'scoped memory for tpu_custom_call.1']
    #allocation7 [shape = 's32[2]{0}', space=sflag, size = 0x8, scoped, tag = 'scoped memory for tpu_custom_call.1']
    #allocation8 [shape = 'u8[16384]{0}', space=vmem, size = 0x4000, scoped, tag = 'input window, operand 1']
    #allocation9 [shape = 's32[2]{0}', space=sflag, size = 0x8, scoped, tag = 'scoped memory for tpu_custom_call.1']
    #allocation10 [shape = 'u8[8192]{0}', space=vmem, size = 0x2000, scoped, tag = 'input window, operand 2']
    #allocation11 [shape = 'u8[8192]{0}', space=vmem, size = 0x2000, scoped, tag = 'input window, operand 3']
    #allocation12 [shape = 's32[2]{0}', space=sflag, size = 0x8, scoped, tag = 'scoped memory for tpu_custom_call.1']
    #allocation13 [shape = 'u8[1024]{0}', space=vmem, size = 0x400, scoped, tag = 'input window, operand 4, single buffered']
    #allocation14 [shape = 'u8[1024]{0}', space=vmem, size = 0x400, scoped, tag = 'input window, operand 5, single buffered']
    #allocation15 [shape = 's32[1]{0}', space=sflag, size = 0x4, scoped, tag = 'scoped memory for tpu_custom_call.1']
    #allocation16 [shape = 'u8[2048]{0}', space=vmem, size = 0x800, scoped, tag = 'input window, operand 7, single buffered']
    #allocation17 [shape = 'u8[8192]{0}', space=vmem, size = 0x2000, scoped, tag = 'output window, operand 0']
    %13 = vsyncpa [#allocation6], 0
    %s14 = scalar_lea.sflag [#allocation6], 1
    %15 = vsyncpa %s14, 0
    %16 = vsyncpa [#allocation9], 0
    %s17 = scalar_lea.sflag [#allocation9], 1
    %18 = vsyncpa %s17, 0
    %19 = vsyncpa [#allocation12], 0
    %s20 = scalar_lea.sflag [#allocation12], 1
    %21 = vsyncpa %s20, 0
    %22 = vsyncpa [#allocation15], 0
    %23 = vsyncpa [#allocation7], 0
    %s24 = scalar_lea.sflag [#allocation7], 1
    %25 = vsyncpa %s24, 0
    loop: start=0, step=1, limit=10
    $region2: #{tpu_custom_call.1} parent=1 // loop_pre_header
      _
    $region3: #{tpu_custom_call.1} parent=1 // loop_header
      %s27 = sphi 0, %s31
      %p28 = scmp.ge.s32.totalorder %s27, 10
      %s34 = sphi 0, %s46
      %s35 = sphi 0, %s42
      %s36 = sphi 0, %s34
      %s37 = sphi 0, %s35
      %s38 = sphi 0, %s36
      %s39 = sphi 0, %s37
      %s51 = sphi 0, %s53
      %s54 = sphi 0, %s51
      %s55 = sphi 0, %s54
      %s71 = sphi 0, %s55
      %s79 = sphi 0, %s81
      %s82 = sphi 0, %s79
      %s83 = sphi 0, %s82
      %s99 = sphi 0, %s83
      %s105 = sphi 0, %s107
      %s108 = sphi 0, %s105
      %s109 = sphi 0, %s108
      %s125 = sphi 0, %s109
      %s131 = sphi 0, %s133
      %s134 = sphi 0, %s131
      %s135 = sphi 0, %s134
      %s151 = sphi 0, %s135
      %s155 = sphi 0, %s155
      %s157 = sphi 0, %s155
      %s158 = sphi 0, %s157
      %s172 = sphi 0, %s158
      %s176 = sphi 0, %s176
      %s178 = sphi 0, %s176
      %s179 = sphi 0, %s178
      %s193 = sphi 0, %s179
      %s197 = sphi 0, %s197
      %s199 = sphi 0, %s197
      %s200 = sphi 0, %s199
      %s214 = sphi 0, %s200
      %s218 = sphi 0, %s218
      %s220 = sphi 0, %s218
      %s221 = sphi 0, %s220
      %s235 = sphi 0, %s221
      %s241 = sphi 0, %s243
      %s244 = sphi 0, %s241
      %s245 = sphi 0, %s244
      %s261 = sphi 0, %s245
    $region4: #{tpu_custom_call.1} parent=1 // loop_header_branch
      %30 = sbr.rel (%p28) target = $region8
    $region5: #{tpu_custom_call.1} parent=1 // loop_body
      %s32 = ssub.s32 %s27, 1
      %s33 = ssub.s32 %s27, 2
      %s40 = sadd.s32 1, %s35
      %p41 = scmp.ge.s32.totalorder %s40, 2
      %s42 = scalar_select %p41, 0, %s40
      %s43 = sadd.s32 1, %s34
      %s44 = scalar_select %p41, %s43, %s34
      %p45 = scmp.ge.s32.totalorder %s44, 4
      %s46 = scalar_select %p45, 0, %s44
      %s47 = ssub.s32 %s35, %s42
      %s48 = ssub.s32 %s34, %s46
      %s49 = sor.u32 %s47, %s48
      %p50 = scmp.eq.s32.totalorder %s49, 0
      %s52 = sadd.s32 %s51, 1
      %s53 = scalar_select %p50, %s51, %s52
      %p56 = pneg %p50
      %p57 = scmp.eq.s32.totalorder %s27, 7
      %p58 = por %p56, %p57
      %p59 = scmp.ne.s32.totalorder %s51, %s54
      %p60 = scmp.eq.s32.totalorder %s27, 0
      %p61 = por %p59, %p60
      %p62 = scmp.ne.s32.totalorder %s51, %s54
      %p63 = scmp.eq.s32.totalorder %s32, 7
      %p64 = por %p62, %p63
      %p65 = scmp.ne.s32.totalorder %s54, %s55
      %p66 = scmp.eq.s32.totalorder %s32, 0
      %p67 = por %p65, %p66
      %p68 = scmp.ne.s32.totalorder %s54, %s55
      %p69 = scmp.eq.s32.totalorder %s33, 7
      %p70 = por %p68, %p69
      %p72 = scmp.ne.s32.totalorder %s55, %s71
      %p73 = scmp.eq.s32.totalorder %s33, 0
      %p74 = por %p72, %p73
      %s75 = ssub.s32 %s35, %s42
      %s76 = ssub.s32 %s34, %s46
      %s77 = sor.u32 %s75, %s76
      %p78 = scmp.eq.s32.totalorder %s77, 0
      %s80 = sadd.s32 %s79, 1
      %s81 = scalar_select %p78, %s79, %s80
      %p84 = pneg %p78
      %p85 = scmp.eq.s32.totalorder %s27, 7
      %p86 = por %p84, %p85
      %p87 = scmp.ne.s32.totalorder %s79, %s82
      %p88 = scmp.eq.s32.totalorder %s27, 0
      %p89 = por %p87, %p88
      %p90 = scmp.ne.s32.totalorder %s79, %s82
      %p91 = scmp.eq.s32.totalorder %s32, 7
      %p92 = por %p90, %p91
      %p93 = scmp.ne.s32.totalorder %s82, %s83
      %p94 = scmp.eq.s32.totalorder %s32, 0
      %p95 = por %p93, %p94
      %p96 = scmp.ne.s32.totalorder %s82, %s83
      %p97 = scmp.eq.s32.totalorder %s33, 7
      %p98 = por %p96, %p97
      %p100 = scmp.ne.s32.totalorder %s83, %s99
      %p101 = scmp.eq.s32.totalorder %s33, 0
      %p102 = por %p100, %p101
      %s103 = ssub.s32 %s34, %s46
      %p104 = scmp.eq.s32.totalorder %s103, 0
      %s106 = sadd.s32 %s105, 1
      %s107 = scalar_select %p104, %s105, %s106
      %p110 = pneg %p104
      %p111 = scmp.eq.s32.totalorder %s27, 7
      %p112 = por %p110, %p111
      %p113 = scmp.ne.s32.totalorder %s105, %s108
      %p114 = scmp.eq.s32.totalorder %s27, 0
      %p115 = por %p113, %p114
      %p116 = scmp.ne.s32.totalorder %s105, %s108
      %p117 = scmp.eq.s32.totalorder %s32, 7
      %p118 = por %p116, %p117
      %p119 = scmp.ne.s32.totalorder %s108, %s109
      %p120 = scmp.eq.s32.totalorder %s32, 0
      %p121 = por %p119, %p120
      %p122 = scmp.ne.s32.totalorder %s108, %s109
      %p123 = scmp.eq.s32.totalorder %s33, 7
      %p124 = por %p122, %p123
      %p126 = scmp.ne.s32.totalorder %s109, %s125
      %p127 = scmp.eq.s32.totalorder %s33, 0
      %p128 = por %p126, %p127
      %s129 = ssub.s32 %s34, %s46
      %p130 = scmp.eq.s32.totalorder %s129, 0
      %s132 = sadd.s32 %s131, 1
      %s133 = scalar_select %p130, %s131, %s132
      %p136 = pneg %p130
      %p137 = scmp.eq.s32.totalorder %s27, 7
      %p138 = por %p136, %p137
      %p139 = scmp.ne.s32.totalorder %s131, %s134
      %p140 = scmp.eq.s32.totalorder %s27, 0
      %p141 = por %p139, %p140
      %p142 = scmp.ne.s32.totalorder %s131, %s134
      %p143 = scmp.eq.s32.totalorder %s32, 7
      %p144 = por %p142, %p143
      %p145 = scmp.ne.s32.totalorder %s134, %s135
      %p146 = scmp.eq.s32.totalorder %s32, 0
      %p147 = por %p145, %p146
      %p148 = scmp.ne.s32.totalorder %s134, %s135
      %p149 = scmp.eq.s32.totalorder %s33, 7
      %p150 = por %p148, %p149
      %p152 = scmp.ne.s32.totalorder %s135, %s151
      %p153 = scmp.eq.s32.totalorder %s33, 0
      %p154 = por %p152, %p153
      %s156 = sadd.s32 %s155, 1
      %p159 = scmp.eq.s32.totalorder %s27, 7
      %p160 = scmp.ne.s32.totalorder %s155, %s157
      %p161 = scmp.eq.s32.totalorder %s27, 0
      %p162 = por %p160, %p161
      %p163 = scmp.ne.s32.totalorder %s155, %s157
      %p164 = scmp.eq.s32.totalorder %s32, 7
      %p165 = por %p163, %p164
      %p166 = scmp.ne.s32.totalorder %s157, %s158
      %p167 = scmp.eq.s32.totalorder %s32, 0
      %p168 = por %p166, %p167
      %p169 = scmp.ne.s32.totalorder %s157, %s158
      %p170 = scmp.eq.s32.totalorder %s33, 7
      %p171 = por %p169, %p170
      %p173 = scmp.ne.s32.totalorder %s158, %s172
      %p174 = scmp.eq.s32.totalorder %s33, 0
      %p175 = por %p173, %p174
      %s177 = sadd.s32 %s176, 1
      %p180 = scmp.eq.s32.totalorder %s27, 7
      %p181 = scmp.ne.s32.totalorder %s176, %s178
      %p182 = scmp.eq.s32.totalorder %s27, 0
      %p183 = por %p181, %p182
      %p184 = scmp.ne.s32.totalorder %s176, %s178
      %p185 = scmp.eq.s32.totalorder %s32, 7
      %p186 = por %p184, %p185
      %p187 = scmp.ne.s32.totalorder %s178, %s179
      %p188 = scmp.eq.s32.totalorder %s32, 0
      %p189 = por %p187, %p188
      %p190 = scmp.ne.s32.totalorder %s178, %s179
      %p191 = scmp.eq.s32.totalorder %s33, 7
      %p192 = por %p190, %p191
      %p194 = scmp.ne.s32.totalorder %s179, %s193
      %p195 = scmp.eq.s32.totalorder %s33, 0
      %p196 = por %p194, %p195
      %s198 = sadd.s32 %s197, 1
      %p201 = scmp.eq.s32.totalorder %s27, 7
      %p202 = scmp.ne.s32.totalorder %s197, %s199
      %p203 = scmp.eq.s32.totalorder %s27, 0
      %p204 = por %p202, %p203
      %p205 = scmp.ne.s32.totalorder %s197, %s199
      %p206 = scmp.eq.s32.totalorder %s32, 7
      %p207 = por %p205, %p206
      %p208 = scmp.ne.s32.totalorder %s199, %s200
      %p209 = scmp.eq.s32.totalorder %s32, 0
      %p210 = por %p208, %p209
      %p211 = scmp.ne.s32.totalorder %s199, %s200
      %p212 = scmp.eq.s32.totalorder %s33, 7
      %p213 = por %p211, %p212
      %p215 = scmp.ne.s32.totalorder %s200, %s214
      %p216 = scmp.eq.s32.totalorder %s33, 0
      %p217 = por %p215, %p216
      %s219 = sadd.s32 %s218, 1
      %p222 = scmp.eq.s32.totalorder %s27, 7
      %p223 = scmp.ne.s32.totalorder %s218, %s220
      %p224 = scmp.eq.s32.totalorder %s27, 0
      %p225 = por %p223, %p224
      %p226 = scmp.ne.s32.totalorder %s218, %s220
      %p227 = scmp.eq.s32.totalorder %s32, 7
      %p228 = por %p226, %p227
      %p229 = scmp.ne.s32.totalorder %s220, %s221
      %p230 = scmp.eq.s32.totalorder %s32, 0
      %p231 = por %p229, %p230
      %p232 = scmp.ne.s32.totalorder %s220, %s221
      %p233 = scmp.eq.s32.totalorder %s33, 7
      %p234 = por %p232, %p233
      %p236 = scmp.ne.s32.totalorder %s221, %s235
      %p237 = scmp.eq.s32.totalorder %s33, 0
      %p238 = por %p236, %p237
      %s239 = ssub.s32 %s34, %s46
      %p240 = scmp.eq.s32.totalorder %s239, 0
      %s242 = sadd.s32 %s241, 1
      %s243 = scalar_select %p240, %s241, %s242
      %p246 = pneg %p240
      %p247 = scmp.eq.s32.totalorder %s27, 7
      %p248 = por %p246, %p247
      %p249 = scmp.ne.s32.totalorder %s241, %s244
      %p250 = scmp.eq.s32.totalorder %s27, 0
      %p251 = por %p249, %p250
      %p252 = scmp.ne.s32.totalorder %s241, %s244
      %p253 = scmp.eq.s32.totalorder %s32, 7
      %p254 = por %p252, %p253
      %p255 = scmp.ne.s32.totalorder %s244, %s245
      %p256 = scmp.eq.s32.totalorder %s32, 0
      %p257 = por %p255, %p256
      %p258 = scmp.ne.s32.totalorder %s244, %s245
      %p259 = scmp.eq.s32.totalorder %s33, 7
      %p260 = por %p258, %p259
      %p262 = scmp.ne.s32.totalorder %s245, %s261
      %p263 = scmp.eq.s32.totalorder %s33, 0
      %p264 = por %p262, %p263
      %p265 = scmp.le.s32.totalorder 1, %s27
      %p266 = scmp.lt.s32.totalorder %s27, 9
      %p267 = pnand %p265, %p266
      %p268 = pneg %p267
      // Predicated region
      $region9: #{tpu_custom_call.1} parent=5 // pred_check
        _
      $region10: #{tpu_custom_call.1} parent=5 // pred_check_branch
        %270 = sbr.rel (%p267) target = $region12
      $region11: #{tpu_custom_call.1} parent=5 // pred_region
        %s271 = ssub.s32 %s27, 1
        // Predicated region
        $region13: #{tpu_custom_call.1} parent=11 // pred_check
          %p272 = pneg %p168
        $region14: #{tpu_custom_call.1} parent=11 // pred_check_branch
          %274 = sbr.rel (%p272) target = $region16
        $region15: #{tpu_custom_call.1} parent=11 // pred_region
          %276 = vsyncadd [#allocation12], 0
          %s278 = sshll.u32 %s4, 4
          %s279 = int_to_ptr.hbm [resolvable:$true] %s278
          %s280 = sshll.u32 [#allocation13], 4
          %s281 = int_to_ptr.vmem [resolvable:$true] %s280
          %283 = dma.hbm_to_vmem [thread:$0]  %s279, 32, %s281, [#allocation12]
        $region16: #{tpu_custom_call.1} parent=11 // pred_fallthru
          _
        // Predicated region
        $region17: #{tpu_custom_call.1} parent=11 // pred_check
          %p284 = pneg %p189
        $region18: #{tpu_custom_call.1} parent=11 // pred_check_branch
          %286 = sbr.rel (%p284) target = $region20
        $region19: #{tpu_custom_call.1} parent=11 // pred_region
          %288 = vsyncadd [#allocation15], 0
          %s290 = sshll.u32 %s5, 4
          %s291 = int_to_ptr.hbm [resolvable:$true] %s290
          %s292 = sshll.u32 [#allocation14], 4
          %s293 = int_to_ptr.vmem [resolvable:$true] %s292
          %295 = dma.hbm_to_vmem [thread:$0]  %s291, 32, %s293, [#allocation15]
        $region20: #{tpu_custom_call.1} parent=11 // pred_fallthru
          _
        // Predicated region
        $region21: #{tpu_custom_call.1} parent=11 // pred_check
          %p296 = pneg %p210
        $region22: #{tpu_custom_call.1} parent=11 // pred_check_branch
          %298 = sbr.rel (%p296) target = $region24
        $region23: #{tpu_custom_call.1} parent=11 // pred_region
          _
        $region24: #{tpu_custom_call.1} parent=11 // pred_fallthru
          _
        // Predicated region
        $region25: #{tpu_custom_call.1} parent=11 // pred_check
          %p299 = pneg %p231
        $region26: #{tpu_custom_call.1} parent=11 // pred_check_branch
          %301 = sbr.rel (%p299) target = $region28
        $region27: #{tpu_custom_call.1} parent=11 // pred_region
          %303 = vsyncadd [#allocation15], 0
          %s304 = sshll.u32 %s7, 4
          %s305 = int_to_ptr.hbm [resolvable:$true] %s304
          %s306 = sshll.u32 [#allocation16], 4
          %s307 = int_to_ptr.vmem [resolvable:$true] %s306
          %312 = dma.hbm_to_vmem [thread:$0]  %s305, 64, %s307, [#allocation15], 32, 32, 2
        $region28: #{tpu_custom_call.1} parent=11 // pred_fallthru
          _
      $region12: #{tpu_custom_call.1} parent=5 // pred_fallthru
        _
      %p313 = scmp.lt.s32.totalorder %s27, 8
      // Predicated region
      $region29: #{tpu_custom_call.1} parent=5 // pred_check
        %p314 = pneg %p313
      $region30: #{tpu_custom_call.1} parent=5 // pred_check_branch
        %316 = sbr.rel (%p314) target = $region32
      $region31: #{tpu_custom_call.1} parent=5 // pred_region
        // Predicated region
        $region33: #{tpu_custom_call.1} parent=31 // pred_check
          %p317 = pneg %p61
        $region34: #{tpu_custom_call.1} parent=31 // pred_check_branch
          %319 = sbr.rel (%p317) target = $region36
        $region35: #{tpu_custom_call.1} parent=31 // pred_region
          %s320 = sand.u32 %s51, 1
          %s321 = scalar_lea.sflag [#allocation6], %s320
          %s322 = sand.u32 %s51, 1
          %s323 = smul.addr %s322, 16
          %s324 = scalar_lea.vmem [#allocation5], %s323
          %s325 = smul.u32 2, %s34
          %327 = vsyncadd %s321, 0
          %s328 = smul.addr %s35, 8
          %s329 = sadd.s32 %s325, %s328
          %s330 = smul.addr %s329, 8
          %s331 = scalar_lea.hbm %s0, %s330
          %s333 = sshll.u32 %s331, 4
          %s334 = int_to_ptr.hbm [resolvable:$true] %s333
          %s335 = sshll.u32 %s324, 4
          %s336 = int_to_ptr.vmem [resolvable:$true] %s335
          %338 = dma.hbm_to_vmem [thread:$0]  %s334, 256, %s336, %s321
        $region36: #{tpu_custom_call.1} parent=31 // pred_fallthru
          _
        // Predicated region
        $region37: #{tpu_custom_call.1} parent=31 // pred_check
          %p339 = pneg %p89
        $region38: #{tpu_custom_call.1} parent=31 // pred_check_branch
          %341 = sbr.rel (%p339) target = $region40
        $region39: #{tpu_custom_call.1} parent=31 // pred_region
          %s342 = sand.u32 %s27, 1
          %s343 = scalar_lea.sflag [#allocation9], %s342
          %s344 = sand.u32 %s79, 1
          %s345 = smul.addr %s344, 16
          %s346 = scalar_lea.vmem [#allocation8], %s345
          %s347 = smul.u32 2, %s34
          %349 = vsyncadd %s343, 0
          %s350 = smul.addr %s35, 8
          %s351 = sadd.s32 %s347, %s350
          %s352 = smul.addr %s351, 8
          %s353 = scalar_lea.hbm %s1, %s352
          %s355 = sshll.u32 %s353, 4
          %s356 = int_to_ptr.hbm [resolvable:$true] %s355
          %s357 = sshll.u32 %s346, 4
          %s358 = int_to_ptr.vmem [resolvable:$true] %s357
          %360 = dma.hbm_to_vmem [thread:$0]  %s356, 256, %s358, %s343
        $region40: #{tpu_custom_call.1} parent=31 // pred_fallthru
          _
        // Predicated region
        $region41: #{tpu_custom_call.1} parent=31 // pred_check
          %p361 = pneg %p115
        $region42: #{tpu_custom_call.1} parent=31 // pred_check_branch
          %363 = sbr.rel (%p361) target = $region44
        $region43: #{tpu_custom_call.1} parent=31 // pred_region
          %s364 = sand.u32 %s27, 1
          %s365 = scalar_lea.sflag [#allocation9], %s364
          %s366 = sand.u32 %s105, 1
          %s367 = smul.addr %s366, 8
          %s368 = scalar_lea.vmem [#allocation10], %s367
          %s369 = smul.u32 2, %s34
          %371 = vsyncadd %s365, 0
          %s372 = smul.addr %s369, 2
          %s373 = scalar_lea.hbm %s2, %s372
          %s374 = sshll.u32 %s373, 4
          %s375 = int_to_ptr.hbm [resolvable:$true] %s374
          %s376 = sshll.u32 %s368, 4
          %s377 = int_to_ptr.vmem [resolvable:$true] %s376
          %382 = dma.hbm_to_vmem [thread:$0]  %s375, 128, %s377, %s365, 256, 64, 4
        $region44: #{tpu_custom_call.1} parent=31 // pred_fallthru
          _
        // Predicated region
        $region45: #{tpu_custom_call.1} parent=31 // pred_check
          %p383 = pneg %p141
        $region46: #{tpu_custom_call.1} parent=31 // pred_check_branch
          %385 = sbr.rel (%p383) target = $region48
        $region47: #{tpu_custom_call.1} parent=31 // pred_region
          %s386 = sand.u32 %s27, 1
          %s387 = scalar_lea.sflag [#allocation12], %s386
          %s388 = sand.u32 %s131, 1
          %s389 = smul.addr %s388, 8
          %s390 = scalar_lea.vmem [#allocation11], %s389
          %s391 = smul.u32 2, %s34
          %393 = vsyncadd %s387, 0
          %s394 = smul.addr %s391, 2
          %s395 = scalar_lea.hbm %s3, %s394
          %s396 = sshll.u32 %s395, 4
          %s397 = int_to_ptr.hbm [resolvable:$true] %s396
          %s398 = sshll.u32 %s390, 4
          %s399 = int_to_ptr.vmem [resolvable:$true] %s398
          %404 = dma.hbm_to_vmem [thread:$0]  %s397, 128, %s399, %s387, 256, 64, 4
        $region48: #{tpu_custom_call.1} parent=31 // pred_fallthru
          _
      $region32: #{tpu_custom_call.1} parent=5 // pred_fallthru
        _
      %p405 = scmp.le.s32.totalorder 1, %s27
      %p406 = scmp.lt.s32.totalorder %s27, 9
      %p407 = pnand %p405, %p406
      %p408 = pneg %p407
      // Predicated region
      $region49: #{tpu_custom_call.1} parent=5 // pred_check
        _
      $region50: #{tpu_custom_call.1} parent=5 // pred_check_branch
        %410 = sbr.rel (%p407) target = $region52
      $region51: #{tpu_custom_call.1} parent=5 // pred_region
        %s411 = ssub.s32 %s27, 1
        %s412 = sand.u32 %s54, 1
        %s413 = scalar_lea.sflag [#allocation6], %s412
        %s414 = sand.u32 %s54, 1
        %s415 = smul.addr %s414, 16
        %s416 = scalar_lea.vmem [#allocation5], %s415
        // Predicated region
        $region53: #{tpu_custom_call.1} parent=51 // pred_check
          %p417 = pneg %p67
        $region54: #{tpu_custom_call.1} parent=51 // pred_check_branch
          %419 = sbr.rel (%p417) target = $region56
        $region55: #{tpu_custom_call.1} parent=51 // pred_region
          %421 = dma.done %s413, 256
        $region56: #{tpu_custom_call.1} parent=51 // pred_fallthru
          _
        %s422 = sand.u32 %s32, 1
        %s423 = scalar_lea.sflag [#allocation9], %s422
        %s424 = sand.u32 %s82, 1
        %s425 = smul.addr %s424, 16
        %s426 = scalar_lea.vmem [#allocation8], %s425
        // Predicated region
        $region57: #{tpu_custom_call.1} parent=51 // pred_check
          %p427 = pneg %p95
        $region58: #{tpu_custom_call.1} parent=51 // pred_check_branch
          %429 = sbr.rel (%p427) target = $region60
        $region59: #{tpu_custom_call.1} parent=51 // pred_region
          %431 = dma.done %s423, 256
        $region60: #{tpu_custom_call.1} parent=51 // pred_fallthru
          _
        %s432 = sand.u32 %s32, 1
        %s433 = scalar_lea.sflag [#allocation9], %s432
        %s434 = sand.u32 %s108, 1
        %s435 = smul.addr %s434, 8
        %s436 = scalar_lea.vmem [#allocation10], %s435
        // Predicated region
        $region61: #{tpu_custom_call.1} parent=51 // pred_check
          %p437 = pneg %p121
        $region62: #{tpu_custom_call.1} parent=51 // pred_check_branch
          %439 = sbr.rel (%p437) target = $region64
        $region63: #{tpu_custom_call.1} parent=51 // pred_region
          %441 = dma.done %s433, 128
        $region64: #{tpu_custom_call.1} parent=51 // pred_fallthru
          _
        %s442 = sand.u32 %s32, 1
        %s443 = scalar_lea.sflag [#allocation12], %s442
        %s444 = sand.u32 %s134, 1
        %s445 = smul.addr %s444, 8
        %s446 = scalar_lea.vmem [#allocation11], %s445
        // Predicated region
        $region65: #{tpu_custom_call.1} parent=51 // pred_check
          %p447 = pneg %p147
        $region66: #{tpu_custom_call.1} parent=51 // pred_check_branch
          %449 = sbr.rel (%p447) target = $region68
        $region67: #{tpu_custom_call.1} parent=51 // pred_region
          %451 = dma.done %s443, 128
        $region68: #{tpu_custom_call.1} parent=51 // pred_fallthru
          _
        // Predicated region
        $region69: #{tpu_custom_call.1} parent=51 // pred_check
          %p452 = pneg %p168
        $region70: #{tpu_custom_call.1} parent=51 // pred_check_branch
          %454 = sbr.rel (%p452) target = $region72
        $region71: #{tpu_custom_call.1} parent=51 // pred_region
          %456 = dma.done [#allocation12], 32
        $region72: #{tpu_custom_call.1} parent=51 // pred_fallthru
          _
        // Predicated region
        $region73: #{tpu_custom_call.1} parent=51 // pred_check
          %p457 = pneg %p189
        $region74: #{tpu_custom_call.1} parent=51 // pred_check_branch
          %459 = sbr.rel (%p457) target = $region76
        $region75: #{tpu_custom_call.1} parent=51 // pred_region
          %461 = dma.done [#allocation15], 32
        $region76: #{tpu_custom_call.1} parent=51 // pred_fallthru
          _
        // Predicated region
        $region77: #{tpu_custom_call.1} parent=51 // pred_check
          %p462 = pneg %p231
        $region78: #{tpu_custom_call.1} parent=51 // pred_check_branch
          %464 = sbr.rel (%p462) target = $region80
        $region79: #{tpu_custom_call.1} parent=51 // pred_region
          %466 = dma.done [#allocation15], 64
        $region80: #{tpu_custom_call.1} parent=51 // pred_fallthru
          _
        %s467 = sand.u32 %s54, 1
        %s468 = scalar_lea.sflag [#allocation6], %s467
        %s469 = sand.u32 %s54, 1
        %s470 = smul.addr %s469, 16
        %s471 = scalar_lea.vmem [#allocation5], %s470
        %p472 = pneg %p67
        %p473 = pneg %p64
        %s474 = sand.u32 %s32, 1
        %s475 = scalar_lea.sflag [#allocation9], %s474
        %s476 = sand.u32 %s82, 1
        %s477 = smul.addr %s476, 16
        %s478 = scalar_lea.vmem [#allocation8], %s477
        %p479 = pneg %p95
        %p480 = pneg %p92
        %s481 = sand.u32 %s32, 1
        %s482 = scalar_lea.sflag [#allocation9], %s481
        %s483 = sand.u32 %s108, 1
        %s484 = smul.addr %s483, 8
        %s485 = scalar_lea.vmem [#allocation10], %s484
        %p486 = pneg %p121
        %p487 = pneg %p118
        %s488 = sand.u32 %s32, 1
        %s489 = scalar_lea.sflag [#allocation12], %s488
        %s490 = sand.u32 %s134, 1
        %s491 = smul.addr %s490, 8
        %s492 = scalar_lea.vmem [#allocation11], %s491
        %p493 = pneg %p147
        %p494 = pneg %p144
        %p495 = pneg %p168
        %p496 = pneg %p165
        %p497 = pneg %p189
        %p498 = pneg %p186
        %p499 = pneg %p210
        %p500 = pneg %p207
        %p501 = pneg %p231
        %p502 = pneg %p228
        %p503 = pneg %p257
        %p504 = pneg %p254
        %s505 = sand.u32 %s244, 1
        %s506 = scalar_lea.sflag [#allocation7], %s505
        %s507 = sand.u32 %s244, 1
        %s508 = smul.addr %s507, 8
        %s509 = scalar_lea.vmem [#allocation17], %s508
        %s510 = smul.u32 2, %s36
        %s511 = smul.u32 2, %s36
        %s512 = smul.u32 2, %s36
        %s513 = smul.u32 2, %s36
        %v514 = vld [vmem:[%s416] sm:$0xff]
        %v515 = vld [vmem:[%s416 + $0x8] sm:$0xff]
        %v516 = vld [vmem:[%s426] sm:$0xff]
        %v517 = vld [vmem:[%s426 + $0x8] sm:$0xff]
        %v518 = vmax.f32 %v514, 0.0
        %v519 = vmax.f32 %v515, 0.0
        %v520 = vand.u32 2147483647, %v514
        %v521 = vand.u32 2147483647, %v515
        %v522 = vsub.f32 0.0, %v520
        %v523 = vsub.f32 0.0, %v521
        %v524 = vmul.f32 %v522, 1.442695
        %v525 = vpow.pop %v524
        %v526 = vmul.f32 %v523, 1.442695
        %v527 = vpow.pop %v526
        %v528 = vadd.f32 %v525, 1.0
        %v529 = vadd.f32 %v527, 1.0
        %v530 = vlog2.pop %v528
        %v531 = vmul.f32 %v530, 0.6931472
        %v532 = vlog2.pop %v529
        %v533 = vmul.f32 %v532, 0.6931472
        %v534 = vadd.f32 %v518, %v531
        %v535 = vadd.f32 %v519, %v533
        %v536 = vsub.f32 %v514, %v534
        %v537 = vsub.f32 %v515, %v535
        %v538 = vmax.f32 %v536, -9.2103405
        %v539 = vmax.f32 %v537, -9.2103405
        %v540 = vmin.f32 %v538, -0.000100005
        %v541 = vmin.f32 %v539, -0.000100005
        %v542 = vsub.f32 0.0, %v534
        %v543 = vsub.f32 0.0, %v535
        %v544 = vmax.f32 %v542, -9.2103405
        %v545 = vmax.f32 %v543, -9.2103405
        %v546 = vmin.f32 %v544, -0.000100005
        %v547 = vmin.f32 %v545, -0.000100005
        %v548 = vmul.f32 %v540, 1.442695
        %v549 = vpow.pop %v548
        %v550 = vmul.f32 %v541, 1.442695
        %v551 = vpow.pop %v550
        %v552 = vsub.f32 1.0, %v549
        %v553 = vsub.f32 1.0, %v551
        %vm554 = vcmp.eq.f32.partialorder %v516, 1.0
        %vm555 = vcmp.eq.f32.partialorder %v517, 1.0
        %v556 = vsub.f32 1.0, %v516
        %v557 = vsub.f32 1.0, %v517
        %v558 = vmul.f32 %v556, %v556
        %v559 = vmul.f32 %v557, %v557
        %v560 = vmul.f32 %v558, %v558
        %v561 = vmul.f32 %v559, %v559
        %v562 = vmul.f32 %v540, %v552
        %v563 = vmul.f32 %v541, %v553
        %v564 = vmul.f32 %v562, %v552
        %v565 = vmul.f32 %v563, %v553
        %v566 = vmul.f32 %v549, %v549
        %v567 = vmul.f32 %v551, %v551
        %v568 = vmul.f32 %v546, %v566
        %v569 = vmul.f32 %v547, %v567
        %v570 = vmul.f32 %v568, %v560
        %v571 = vmul.f32 %v569, %v561
        %vm572 = vcmp.lt.f32.partialorder %v516, 1.0
        %vm573 = vcmp.lt.f32.partialorder %v517, 1.0
        %v574 = vsel %vm572, %v570, 0.0
        %v575 = vsel %vm573, %v571, 0.0
        %v576 = vsel %vm554, %v564, %v574
        %v577 = vsel %vm555, %v565, %v575
        %v578 = vsel %vm554, 1, 0
        %v579 = vsel %vm555, 1, 0
        %v580 = vcvt.s32.f32 %v578
        %v581 = vcvt.s32.f32 %v579
        %p582 = scmp.eq.s32.totalorder %s37, 0
        // Predicated region
        $region81: #{tpu_custom_call.1} parent=51 // pred_check
          %p583 = pneg %p582
        $region82: #{tpu_custom_call.1} parent=51 // pred_check_branch
          %585 = sbr.rel (%p583) target = $region84
        $region83: #{tpu_custom_call.1} parent=51 // pred_region
          %586 = vst [vmem:[#allocation2] sm:$0xff] %v580
          %587 = vst [vmem:[#allocation2 + $0x8] sm:$0xff] %v581
          %588 = vst [vmem:[#allocation3] sm:$0xff] %v576
          %589 = vst [vmem:[#allocation3 + $0x8] sm:$0xff] %v577
        $region84: #{tpu_custom_call.1} parent=51 // pred_fallthru
          _
        %p590 = scmp.gt.s32.totalorder %s37, 0
        // Predicated region
        $region85: #{tpu_custom_call.1} parent=51 // pred_check
          %p591 = pneg %p590
        $region86: #{tpu_custom_call.1} parent=51 // pred_check_branch
          %593 = sbr.rel (%p591) target = $region88
        $region87: #{tpu_custom_call.1} parent=51 // pred_region
          %v594 = vld [vmem:[#allocation2] sm:$0xff]
          %v595 = vld [vmem:[#allocation2 + $0x8] sm:$0xff]
          %v596 = vadd.f32 %v594, %v580
          %v597 = vadd.f32 %v595, %v581
          %598 = vst [vmem:[#allocation2] sm:$0xff] %v596
          %599 = vst [vmem:[#allocation2 + $0x8] sm:$0xff] %v597
          %v600 = vld [vmem:[#allocation3] sm:$0xff]
          %v601 = vld [vmem:[#allocation3 + $0x8] sm:$0xff]
          %v602 = vadd.f32 %v600, %v576
          %v603 = vadd.f32 %v601, %v577
          %604 = vst [vmem:[#allocation3] sm:$0xff] %v602
          %605 = vst [vmem:[#allocation3 + $0x8] sm:$0xff] %v603
        $region88: #{tpu_custom_call.1} parent=51 // pred_fallthru
          _
        // Predicated region
        $region89: #{tpu_custom_call.1} parent=51 // pred_check
          %p606 = pneg %p582
        $region90: #{tpu_custom_call.1} parent=51 // pred_check_branch
          %608 = sbr.rel (%p606) target = $region92
        $region91: #{tpu_custom_call.1} parent=51 // pred_region
          %v609 = vld [vmem:[#allocation13] sm:$0x3]
          %v610 = vld [vmem:[#allocation14] sm:$0x3]
          %s611 = smul.u32 %s36, 256
          %v612 = vstv %s611
          %v613 = vsub.s32 %v609, %v612
          %vm614 = vcmp.ge.s32.totalorder %v613, 0
          %vm615 = vcmp.lt.s32.totalorder %v613, 256
          %vm616 = vmand %vm614, %vm615
          %v617 = vsel %vm616, 1, 0
          %v618 = vcvt.s32.f32 %v617
          %v619 = vlaneseq
          %v620 = vand.u32 %v619, 127
          %v621 = vadd.s32 %v620, 128
          %v622 = vperm.slane %v613, 0
          %v623 = vlaneseq
          %v624 = vshrl.u32 %v623, 7
          %626 = vset.pattern.permute.xlu0 %v624
          %627 = vperm.xlu0 %626, %v622
          %v628 = vpop.permute.xlu0 %627
          %v629 = vperm.slane %v613, 1
          %v630 = vlaneseq
          %v631 = vshrl.u32 %v630, 7
          %633 = vset.pattern.permute.xlu0 %v631
          %634 = vperm.xlu0 %633, %v629
          %v635 = vpop.permute.xlu0 %634
          %vm636 = vcmp.eq.s32.totalorder %v620, %v628
          %vm637 = vcmp.eq.s32.totalorder %v621, %v628
          %vm638 = vcmp.eq.s32.totalorder %v620, %v635
          %vm639 = vcmp.eq.s32.totalorder %v621, %v635
          %v640 = vsel %vm636, 1, 0
          %v641 = vsel %vm637, 1, 0
          %v642 = vsel %vm638, 1, 0
          %v643 = vsel %vm639, 1, 0
          %v644 = vcvt.s32.f32 %v640
          %v645 = vcvt.s32.f32 %v641
          %v646 = vcvt.s32.f32 %v642
          %v647 = vcvt.s32.f32 %v643
          %v648 = vld [vmem:[%s436] sm:$0xf]
          %v649 = vld [vmem:[%s436 + $0x4] sm:$0xf]
          %v650 = vld [vmem:[%s446] sm:$0xf]
          %v651 = vld [vmem:[%s446 + $0x4] sm:$0xf]
          %653 = vst [vmem:[#allocation1] ss:$4 sm:$0xff] %v648
          %v654 = vld.sshfl [vmem:[#allocation1] sm:$0xff pattern:$0x73625140]
          %v655 = vld.sshfl [vmem:[#allocation1 + $0x8] sm:$0xff pattern:$0x73625140]
          %658 = vmatpush.xpose.msra.mxu0 0.0
          %659 = vmatpush.xpose.msra.mxu0 0.0
          %660 = vmatpush.xpose.msra.mxu0 0.0
          %661 = vmatpush.xpose.msra.mxu0 0.0
          %662 = vmatpush.xpose.msra.mxu0 0.0
          %663 = vmatpush.xpose.msra.mxu0 0.0
          %664 = vmatpush.xpose.msra.mxu0 0.0
          %665 = vmatpush.xpose.msra.mxu0 0.0
          %666 = vmatpush.xpose.msra.mxu0 0.0
          %667 = vmatpush.xpose.msra.mxu0 0.0
          %668 = vmatpush.xpose.msra.mxu0 0.0
          %669 = vmatpush.xpose.msra.mxu0 0.0
          %670 = vmatpush.xpose.msra.mxu0 0.0
          %671 = vmatpush.xpose.msra.mxu0 0.0
          %672 = vmatpush.xpose.msra.mxu0 0.0
          %v673 = vand.u32 %v644, 4294901760
          %674 = vmatpush.xpose.msra.mxu0 %v673
          %v675 = vand.u32 %v654, 4294901760
          %v676 = vsub.f32 %v654, %v675
          %v677 = vand.u32 %v676, 4294901760
          %v678 = vsub.f32 %v676, %v677
          %v679 = vand.u32 %v678, 4294901760
          %680 = vmatmul.f32.gmra.mxu0 %v679
          %v681 = vpop.f32.mrf.mxu0
          %v682 = vadd.f32 0.0, %v681
          %683 = vdwg.mxu0
          %684 = vmatpush.xpose.msra.mxu0 0.0
          %685 = vmatpush.xpose.msra.mxu0 0.0
          %686 = vmatpush.xpose.msra.mxu0 0.0
          %687 = vmatpush.xpose.msra.mxu0 0.0
          %688 = vmatpush.xpose.msra.mxu0 0.0
          %689 = vmatpush.xpose.msra.mxu0 0.0
          %690 = vmatpush.xpose.msra.mxu0 0.0
          %691 = vmatpush.xpose.msra.mxu0 0.0
          %692 = vmatpush.xpose.msra.mxu0 0.0
          %693 = vmatpush.xpose.msra.mxu0 0.0
          %694 = vmatpush.xpose.msra.mxu0 0.0
          %695 = vmatpush.xpose.msra.mxu0 0.0
          %696 = vmatpush.xpose.msra.mxu0 0.0
          %697 = vmatpush.xpose.msra.mxu0 0.0
          %698 = vmatpush.xpose.msra.mxu0 0.0
          %v699 = vand.u32 %v644, 4294901760
          %v700 = vsub.f32 %v644, %v699
          %v701 = vand.u32 %v700, 4294901760
          %v702 = vsub.f32 %v700, %v701
          %v703 = vand.u32 %v702, 4294901760
          %704 = vmatpush.xpose.msra.mxu0 %v703
          %v705 = vand.u32 %v654, 4294901760
          %706 = vmatmul.f32.gmra.mxu0 %v705
          %v707 = vpop.f32.mrf.mxu0
          %v708 = vadd.f32 %v682, %v707
          %709 = vdwg.mxu0
          %710 = vmatpush.xpose.msra.mxu0 0.0
          %711 = vmatpush.xpose.msra.mxu0 0.0
          %712 = vmatpush.xpose.msra.mxu0 0.0
          %713 = vmatpush.xpose.msra.mxu0 0.0
          %714 = vmatpush.xpose.msra.mxu0 0.0
          %715 = vmatpush.xpose.msra.mxu0 0.0
          %716 = vmatpush.xpose.msra.mxu0 0.0
          %717 = vmatpush.xpose.msra.mxu0 0.0
          %718 = vmatpush.xpose.msra.mxu0 0.0
          %719 = vmatpush.xpose.msra.mxu0 0.0
          %720 = vmatpush.xpose.msra.mxu0 0.0
          %721 = vmatpush.xpose.msra.mxu0 0.0
          %722 = vmatpush.xpose.msra.mxu0 0.0
          %723 = vmatpush.xpose.msra.mxu0 0.0
          %724 = vmatpush.xpose.msra.mxu0 0.0
          %v725 = vand.u32 %v644, 4294901760
          %v726 = vsub.f32 %v644, %v725
          %727 = vmatpush.xpose.msra.mxu0 %v726
          %v728 = vand.u32 %v654, 4294901760
          %v729 = vsub.f32 %v654, %v728
          %730 = vmatmul.f32.gmra.mxu0 %v729
          %v731 = vpop.f32.mrf.mxu0
          %v732 = vadd.f32 %v708, %v731
          %733 = vdwg.mxu0
          %734 = vmatpush.xpose.msra.mxu0 0.0
          %735 = vmatpush.xpose.msra.mxu0 0.0
          %736 = vmatpush.xpose.msra.mxu0 0.0
          %737 = vmatpush.xpose.msra.mxu0 0.0
          %738 = vmatpush.xpose.msra.mxu0 0.0
          %739 = vmatpush.xpose.msra.mxu0 0.0
          %740 = vmatpush.xpose.msra.mxu0 0.0
          %741 = vmatpush.xpose.msra.mxu0 0.0
          %742 = vmatpush.xpose.msra.mxu0 0.0
          %743 = vmatpush.xpose.msra.mxu0 0.0
          %744 = vmatpush.xpose.msra.mxu0 0.0
          %745 = vmatpush.xpose.msra.mxu0 0.0
          %746 = vmatpush.xpose.msra.mxu0 0.0
          %747 = vmatpush.xpose.msra.mxu0 0.0
          %748 = vmatpush.xpose.msra.mxu0 0.0
          %v749 = vand.u32 %v644, 4294901760
          %750 = vmatpush.xpose.msra.mxu0 %v749
          %v751 = vand.u32 %v654, 4294901760
          %v752 = vsub.f32 %v654, %v751
          %v753 = vand.u32 %v752, 4294901760
          %754 = vmatmul.f32.gmra.mxu0 %v753
          %v755 = vpop.f32.mrf.mxu0
          %v756 = vadd.f32 %v732, %v755
          %757 = vdwg.mxu0
          %758 = vmatpush.xpose.msra.mxu0 0.0
          %759 = vmatpush.xpose.msra.mxu0 0.0
          %760 = vmatpush.xpose.msra.mxu0 0.0
          %761 = vmatpush.xpose.msra.mxu0 0.0
          %762 = vmatpush.xpose.msra.mxu0 0.0
          %763 = vmatpush.xpose.msra.mxu0 0.0
          %764 = vmatpush.xpose.msra.mxu0 0.0
          %765 = vmatpush.xpose.msra.mxu0 0.0
          %766 = vmatpush.xpose.msra.mxu0 0.0
          %767 = vmatpush.xpose.msra.mxu0 0.0
          %768 = vmatpush.xpose.msra.mxu0 0.0
          %769 = vmatpush.xpose.msra.mxu0 0.0
          %770 = vmatpush.xpose.msra.mxu0 0.0
          %771 = vmatpush.xpose.msra.mxu0 0.0
          %772 = vmatpush.xpose.msra.mxu0 0.0
          %v773 = vand.u32 %v644, 4294901760
          %v774 = vsub.f32 %v644, %v773
          %v775 = vand.u32 %v774, 4294901760
          %776 = vmatpush.xpose.msra.mxu0 %v775
          %v777 = vand.u32 %v654, 4294901760
          %778 = vmatmul.f32.gmra.mxu0 %v777
          %v779 = vpop.f32.mrf.mxu0
          %v780 = vadd.f32 %v756, %v779
          %781 = vdwg.mxu0
          %782 = vmatpush.xpose.msra.mxu0 0.0
          %783 = vmatpush.xpose.msra.mxu0 0.0
          %784 = vmatpush.xpose.msra.mxu0 0.0
          %785 = vmatpush.xpose.msra.mxu0 0.0
          %786 = vmatpush.xpose.msra.mxu0 0.0
          %787 = vmatpush.xpose.msra.mxu0 0.0
          %788 = vmatpush.xpose.msra.mxu0 0.0
          %789 = vmatpush.xpose.msra.mxu0 0.0
          %790 = vmatpush.xpose.msra.mxu0 0.0
          %791 = vmatpush.xpose.msra.mxu0 0.0
          %792 = vmatpush.xpose.msra.mxu0 0.0
          %793 = vmatpush.xpose.msra.mxu0 0.0
          %794 = vmatpush.xpose.msra.mxu0 0.0
          %795 = vmatpush.xpose.msra.mxu0 0.0
          %796 = vmatpush.xpose.msra.mxu0 0.0
          %v797 = vand.u32 %v644, 4294901760
          %798 = vmatpush.xpose.msra.mxu0 %v797
          %v799 = vand.u32 %v654, 4294901760
          %800 = vmatmul.f32.gmra.mxu0 %v799
          %v801 = vpop.f32.mrf.mxu0
          %v802 = vadd.f32 %v780, %v801
          %803 = vdwg.mxu0
          %804 = vmatpush.xpose.msra.mxu0 0.0
          %805 = vmatpush.xpose.msra.mxu0 0.0
          %806 = vmatpush.xpose.msra.mxu0 0.0
          %807 = vmatpush.xpose.msra.mxu0 0.0
          %808 = vmatpush.xpose.msra.mxu0 0.0
          %809 = vmatpush.xpose.msra.mxu0 0.0
          %810 = vmatpush.xpose.msra.mxu0 0.0
          %811 = vmatpush.xpose.msra.mxu0 0.0
          %812 = vmatpush.xpose.msra.mxu0 0.0
          %813 = vmatpush.xpose.msra.mxu0 0.0
          %814 = vmatpush.xpose.msra.mxu0 0.0
          %815 = vmatpush.xpose.msra.mxu0 0.0
          %816 = vmatpush.xpose.msra.mxu0 0.0
          %817 = vmatpush.xpose.msra.mxu0 0.0
          %818 = vmatpush.xpose.msra.mxu0 0.0
          %v819 = vand.u32 %v645, 4294901760
          %820 = vmatpush.xpose.msra.mxu0 %v819
          %v821 = vand.u32 %v655, 4294901760
          %v822 = vsub.f32 %v655, %v821
          %v823 = vand.u32 %v822, 4294901760
          %v824 = vsub.f32 %v822, %v823
          %v825 = vand.u32 %v824, 4294901760
          %826 = vmatmul.f32.gmra.mxu0 %v825
          %v827 = vpop.f32.mrf.mxu0
          %v828 = vadd.f32 %v802, %v827
          %829 = vdwg.mxu0
          %830 = vmatpush.xpose.msra.mxu0 0.0
          %831 = vmatpush.xpose.msra.mxu0 0.0
          %832 = vmatpush.xpose.msra.mxu0 0.0
          %833 = vmatpush.xpose.msra.mxu0 0.0
          %834 = vmatpush.xpose.msra.mxu0 0.0
          %835 = vmatpush.xpose.msra.mxu0 0.0
          %836 = vmatpush.xpose.msra.mxu0 0.0
          %837 = vmatpush.xpose.msra.mxu0 0.0
          %838 = vmatpush.xpose.msra.mxu0 0.0
          %839 = vmatpush.xpose.msra.mxu0 0.0
          %840 = vmatpush.xpose.msra.mxu0 0.0
          %841 = vmatpush.xpose.msra.mxu0 0.0
          %842 = vmatpush.xpose.msra.mxu0 0.0
          %843 = vmatpush.xpose.msra.mxu0 0.0
          %844 = vmatpush.xpose.msra.mxu0 0.0
          %v845 = vand.u32 %v645, 4294901760
          %v846 = vsub.f32 %v645, %v845
          %v847 = vand.u32 %v846, 4294901760
          %v848 = vsub.f32 %v846, %v847
          %v849 = vand.u32 %v848, 4294901760
          %850 = vmatpush.xpose.msra.mxu0 %v849
          %v851 = vand.u32 %v655, 4294901760
          %852 = vmatmul.f32.gmra.mxu0 %v851
          %v853 = vpop.f32.mrf.mxu0
          %v854 = vadd.f32 %v828, %v853
          %855 = vdwg.mxu0
          %856 = vmatpush.xpose.msra.mxu0 0.0
          %857 = vmatpush.xpose.msra.mxu0 0.0
          %858 = vmatpush.xpose.msra.mxu0 0.0
          %859 = vmatpush.xpose.msra.mxu0 0.0
          %860 = vmatpush.xpose.msra.mxu0 0.0
          %861 = vmatpush.xpose.msra.mxu0 0.0
          %862 = vmatpush.xpose.msra.mxu0 0.0
          %863 = vmatpush.xpose.msra.mxu0 0.0
          %864 = vmatpush.xpose.msra.mxu0 0.0
          %865 = vmatpush.xpose.msra.mxu0 0.0
          %866 = vmatpush.xpose.msra.mxu0 0.0
          %867 = vmatpush.xpose.msra.mxu0 0.0
          %868 = vmatpush.xpose.msra.mxu0 0.0
          %869 = vmatpush.xpose.msra.mxu0 0.0
          %870 = vmatpush.xpose.msra.mxu0 0.0
          %v871 = vand.u32 %v645, 4294901760
          %v872 = vsub.f32 %v645, %v871
          %873 = vmatpush.xpose.msra.mxu0 %v872
          %v874 = vand.u32 %v655, 4294901760
          %v875 = vsub.f32 %v655, %v874
          %876 = vmatmul.f32.gmra.mxu0 %v875
          %v877 = vpop.f32.mrf.mxu0
          %v878 = vadd.f32 %v854, %v877
          %879 = vdwg.mxu0
          %880 = vmatpush.xpose.msra.mxu0 0.0
          %881 = vmatpush.xpose.msra.mxu0 0.0
          %882 = vmatpush.xpose.msra.mxu0 0.0
          %883 = vmatpush.xpose.msra.mxu0 0.0
          %884 = vmatpush.xpose.msra.mxu0 0.0
          %885 = vmatpush.xpose.msra.mxu0 0.0
          %886 = vmatpush.xpose.msra.mxu0 0.0
          %887 = vmatpush.xpose.msra.mxu0 0.0
          %888 = vmatpush.xpose.msra.mxu0 0.0
          %889 = vmatpush.xpose.msra.mxu0 0.0
          %890 = vmatpush.xpose.msra.mxu0 0.0
          %891 = vmatpush.xpose.msra.mxu0 0.0
          %892 = vmatpush.xpose.msra.mxu0 0.0
          %893 = vmatpush.xpose.msra.mxu0 0.0
          %894 = vmatpush.xpose.msra.mxu0 0.0
          %v895 = vand.u32 %v645, 4294901760
          %896 = vmatpush.xpose.msra.mxu0 %v895
          %v897 = vand.u32 %v655, 4294901760
          %v898 = vsub.f32 %v655, %v897
          %v899 = vand.u32 %v898, 4294901760
          %900 = vmatmul.f32.gmra.mxu0 %v899
          %v901 = vpop.f32.mrf.mxu0
          %v902 = vadd.f32 %v878, %v901
          %903 = vdwg.mxu0
          %904 = vmatpush.xpose.msra.mxu0 0.0
          %905 = vmatpush.xpose.msra.mxu0 0.0
          %906 = vmatpush.xpose.msra.mxu0 0.0
          %907 = vmatpush.xpose.msra.mxu0 0.0
          %908 = vmatpush.xpose.msra.mxu0 0.0
          %909 = vmatpush.xpose.msra.mxu0 0.0
          %910 = vmatpush.xpose.msra.mxu0 0.0
          %911 = vmatpush.xpose.msra.mxu0 0.0
          %912 = vmatpush.xpose.msra.mxu0 0.0
          %913 = vmatpush.xpose.msra.mxu0 0.0
          %914 = vmatpush.xpose.msra.mxu0 0.0
          %915 = vmatpush.xpose.msra.mxu0 0.0
          %916 = vmatpush.xpose.msra.mxu0 0.0
          %917 = vmatpush.xpose.msra.mxu0 0.0
          %918 = vmatpush.xpose.msra.mxu0 0.0
          %v919 = vand.u32 %v645, 4294901760
          %v920 = vsub.f32 %v645, %v919
          %v921 = vand.u32 %v920, 4294901760
          %922 = vmatpush.xpose.msra.mxu0 %v921
          %v923 = vand.u32 %v655, 4294901760
          %924 = vmatmul.f32.gmra.mxu0 %v923
          %v925 = vpop.f32.mrf.mxu0
          %v926 = vadd.f32 %v902, %v925
          %927 = vdwg.mxu0
          %928 = vmatpush.xpose.msra.mxu0 0.0
          %929 = vmatpush.xpose.msra.mxu0 0.0
          %930 = vmatpush.xpose.msra.mxu0 0.0
          %931 = vmatpush.xpose.msra.mxu0 0.0
          %932 = vmatpush.xpose.msra.mxu0 0.0
          %933 = vmatpush.xpose.msra.mxu0 0.0
          %934 = vmatpush.xpose.msra.mxu0 0.0
          %935 = vmatpush.xpose.msra.mxu0 0.0
          %936 = vmatpush.xpose.msra.mxu0 0.0
          %937 = vmatpush.xpose.msra.mxu0 0.0
          %938 = vmatpush.xpose.msra.mxu0 0.0
          %939 = vmatpush.xpose.msra.mxu0 0.0
          %940 = vmatpush.xpose.msra.mxu0 0.0
          %941 = vmatpush.xpose.msra.mxu0 0.0
          %942 = vmatpush.xpose.msra.mxu0 0.0
          %v943 = vand.u32 %v645, 4294901760
          %944 = vmatpush.xpose.msra.mxu0 %v943
          %v945 = vand.u32 %v655, 4294901760
          %946 = vmatmul.f32.gmra.mxu0 %v945
          %v947 = vpop.f32.mrf.mxu0
          %v948 = vadd.f32 %v926, %v947
          %949 = vdwg.mxu0
          %951 = vst [vmem:[#allocation1] ss:$4 sm:$0xff] %v649
          %v952 = vld.sshfl [vmem:[#allocation1] sm:$0xff pattern:$0x73625140]
          %v953 = vld.sshfl [vmem:[#allocation1 + $0x8] sm:$0xff pattern:$0x73625140]
          %956 = vmatpush.xpose.msra.mxu0 0.0
          %957 = vmatpush.xpose.msra.mxu0 0.0
          %958 = vmatpush.xpose.msra.mxu0 0.0
          %959 = vmatpush.xpose.msra.mxu0 0.0
          %960 = vmatpush.xpose.msra.mxu0 0.0
          %961 = vmatpush.xpose.msra.mxu0 0.0
          %962 = vmatpush.xpose.msra.mxu0 0.0
          %963 = vmatpush.xpose.msra.mxu0 0.0
          %964 = vmatpush.xpose.msra.mxu0 0.0
          %965 = vmatpush.xpose.msra.mxu0 0.0
          %966 = vmatpush.xpose.msra.mxu0 0.0
          %967 = vmatpush.xpose.msra.mxu0 0.0
          %968 = vmatpush.xpose.msra.mxu0 0.0
          %969 = vmatpush.xpose.msra.mxu0 0.0
          %970 = vmatpush.xpose.msra.mxu0 0.0
          %v971 = vand.u32 %v646, 4294901760
          %972 = vmatpush.xpose.msra.mxu0 %v971
          %v973 = vand.u32 %v952, 4294901760
          %v974 = vsub.f32 %v952, %v973
          %v975 = vand.u32 %v974, 4294901760
          %v976 = vsub.f32 %v974, %v975
          %v977 = vand.u32 %v976, 4294901760
          %978 = vmatmul.f32.gmra.mxu0 %v977
          %v979 = vpop.f32.mrf.mxu0
          %v980 = vadd.f32 0.0, %v979
          %981 = vdwg.mxu0
          %982 = vmatpush.xpose.msra.mxu0 0.0
          %983 = vmatpush.xpose.msra.mxu0 0.0
          %984 = vmatpush.xpose.msra.mxu0 0.0
          %985 = vmatpush.xpose.msra.mxu0 0.0
          %986 = vmatpush.xpose.msra.mxu0 0.0
          %987 = vmatpush.xpose.msra.mxu0 0.0
          %988 = vmatpush.xpose.msra.mxu0 0.0
          %989 = vmatpush.xpose.msra.mxu0 0.0
          %990 = vmatpush.xpose.msra.mxu0 0.0
          %991 = vmatpush.xpose.msra.mxu0 0.0
          %992 = vmatpush.xpose.msra.mxu0 0.0
          %993 = vmatpush.xpose.msra.mxu0 0.0
          %994 = vmatpush.xpose.msra.mxu0 0.0
          %995 = vmatpush.xpose.msra.mxu0 0.0
          %996 = vmatpush.xpose.msra.mxu0 0.0
          %v997 = vand.u32 %v646, 4294901760
          %v998 = vsub.f32 %v646, %v997
          %v999 = vand.u32 %v998, 4294901760
          %v1000 = vsub.f32 %v998, %v999
          %v1001 = vand.u32 %v1000, 4294901760
          %1002 = vmatpush.xpose.msra.mxu0 %v1001
          %v1003 = vand.u32 %v952, 4294901760
          %1004 = vmatmul.f32.gmra.mxu0 %v1003
          %v1005 = vpop.f32.mrf.mxu0
          %v1006 = vadd.f32 %v980, %v1005
          %1007 = vdwg.mxu0
          %1008 = vmatpush.xpose.msra.mxu0 0.0
          %1009 = vmatpush.xpose.msra.mxu0 0.0
          %1010 = vmatpush.xpose.msra.mxu0 0.0
          %1011 = vmatpush.xpose.msra.mxu0 0.0
          %1012 = vmatpush.xpose.msra.mxu0 0.0
          %1013 = vmatpush.xpose.msra.mxu0 0.0
          %1014 = vmatpush.xpose.msra.mxu0 0.0
          %1015 = vmatpush.xpose.msra.mxu0 0.0
          %1016 = vmatpush.xpose.msra.mxu0 0.0
          %1017 = vmatpush.xpose.msra.mxu0 0.0
          %1018 = vmatpush.xpose.msra.mxu0 0.0
          %1019 = vmatpush.xpose.msra.mxu0 0.0
          %1020 = vmatpush.xpose.msra.mxu0 0.0
          %1021 = vmatpush.xpose.msra.mxu0 0.0
          %1022 = vmatpush.xpose.msra.mxu0 0.0
          %v1023 = vand.u32 %v646, 4294901760
          %v1024 = vsub.f32 %v646, %v1023
          %1025 = vmatpush.xpose.msra.mxu0 %v1024
          %v1026 = vand.u32 %v952, 4294901760
          %v1027 = vsub.f32 %v952, %v1026
          %1028 = vmatmul.f32.gmra.mxu0 %v1027
          %v1029 = vpop.f32.mrf.mxu0
          %v1030 = vadd.f32 %v1006, %v1029
          %1031 = vdwg.mxu0
          %1032 = vmatpush.xpose.msra.mxu0 0.0
          %1033 = vmatpush.xpose.msra.mxu0 0.0
          %1034 = vmatpush.xpose.msra.mxu0 0.0
          %1035 = vmatpush.xpose.msra.mxu0 0.0
          %1036 = vmatpush.xpose.msra.mxu0 0.0
          %1037 = vmatpush.xpose.msra.mxu0 0.0
          %1038 = vmatpush.xpose.msra.mxu0 0.0
          %1039 = vmatpush.xpose.msra.mxu0 0.0
          %1040 = vmatpush.xpose.msra.mxu0 0.0
          %1041 = vmatpush.xpose.msra.mxu0 0.0
          %1042 = vmatpush.xpose.msra.mxu0 0.0
          %1043 = vmatpush.xpose.msra.mxu0 0.0
          %1044 = vmatpush.xpose.msra.mxu0 0.0
          %1045 = vmatpush.xpose.msra.mxu0 0.0
          %1046 = vmatpush.xpose.msra.mxu0 0.0
          %v1047 = vand.u32 %v646, 4294901760
          %1048 = vmatpush.xpose.msra.mxu0 %v1047
          %v1049 = vand.u32 %v952, 4294901760
          %v1050 = vsub.f32 %v952, %v1049
          %v1051 = vand.u32 %v1050, 4294901760
          %1052 = vmatmul.f32.gmra.mxu0 %v1051
          %v1053 = vpop.f32.mrf.mxu0
          %v1054 = vadd.f32 %v1030, %v1053
          %1055 = vdwg.mxu0
          %1056 = vmatpush.xpose.msra.mxu0 0.0
          %1057 = vmatpush.xpose.msra.mxu0 0.0
          %1058 = vmatpush.xpose.msra.mxu0 0.0
          %1059 = vmatpush.xpose.msra.mxu0 0.0
          %1060 = vmatpush.xpose.msra.mxu0 0.0
          %1061 = vmatpush.xpose.msra.mxu0 0.0
          %1062 = vmatpush.xpose.msra.mxu0 0.0
          %1063 = vmatpush.xpose.msra.mxu0 0.0
          %1064 = vmatpush.xpose.msra.mxu0 0.0
          %1065 = vmatpush.xpose.msra.mxu0 0.0
          %1066 = vmatpush.xpose.msra.mxu0 0.0
          %1067 = vmatpush.xpose.msra.mxu0 0.0
          %1068 = vmatpush.xpose.msra.mxu0 0.0
          %1069 = vmatpush.xpose.msra.mxu0 0.0
          %1070 = vmatpush.xpose.msra.mxu0 0.0
          %v1071 = vand.u32 %v646, 4294901760
          %v1072 = vsub.f32 %v646, %v1071
          %v1073 = vand.u32 %v1072, 4294901760
          %1074 = vmatpush.xpose.msra.mxu0 %v1073
          %v1075 = vand.u32 %v952, 4294901760
          %1076 = vmatmul.f32.gmra.mxu0 %v1075
          %v1077 = vpop.f32.mrf.mxu0
          %v1078 = vadd.f32 %v1054, %v1077
          %1079 = vdwg.mxu0
          %1080 = vmatpush.xpose.msra.mxu0 0.0
          %1081 = vmatpush.xpose.msra.mxu0 0.0
          %1082 = vmatpush.xpose.msra.mxu0 0.0
          %1083 = vmatpush.xpose.msra.mxu0 0.0
          %1084 = vmatpush.xpose.msra.mxu0 0.0
          %1085 = vmatpush.xpose.msra.mxu0 0.0
          %1086 = vmatpush.xpose.msra.mxu0 0.0
          %1087 = vmatpush.xpose.msra.mxu0 0.0
          %1088 = vmatpush.xpose.msra.mxu0 0.0
          %1089 = vmatpush.xpose.msra.mxu0 0.0
          %1090 = vmatpush.xpose.msra.mxu0 0.0
          %1091 = vmatpush.xpose.msra.mxu0 0.0
          %1092 = vmatpush.xpose.msra.mxu0 0.0
          %1093 = vmatpush.xpose.msra.mxu0 0.0
          %1094 = vmatpush.xpose.msra.mxu0 0.0
          %v1095 = vand.u32 %v646, 4294901760
          %1096 = vmatpush.xpose.msra.mxu0 %v1095
          %v1097 = vand.u32 %v952, 4294901760
          %1098 = vmatmul.f32.gmra.mxu0 %v1097
          %v1099 = vpop.f32.mrf.mxu0
          %v1100 = vadd.f32 %v1078, %v1099
          %1101 = vdwg.mxu0
          %1102 = vmatpush.xpose.msra.mxu0 0.0
          %1103 = vmatpush.xpose.msra.mxu0 0.0
          %1104 = vmatpush.xpose.msra.mxu0 0.0
          %1105 = vmatpush.xpose.msra.mxu0 0.0
          %1106 = vmatpush.xpose.msra.mxu0 0.0
          %1107 = vmatpush.xpose.msra.mxu0 0.0
          %1108 = vmatpush.xpose.msra.mxu0 0.0
          %1109 = vmatpush.xpose.msra.mxu0 0.0
          %1110 = vmatpush.xpose.msra.mxu0 0.0
          %1111 = vmatpush.xpose.msra.mxu0 0.0
          %1112 = vmatpush.xpose.msra.mxu0 0.0
          %1113 = vmatpush.xpose.msra.mxu0 0.0
          %1114 = vmatpush.xpose.msra.mxu0 0.0
          %1115 = vmatpush.xpose.msra.mxu0 0.0
          %1116 = vmatpush.xpose.msra.mxu0 0.0
          %v1117 = vand.u32 %v647, 4294901760
          %1118 = vmatpush.xpose.msra.mxu0 %v1117
          %v1119 = vand.u32 %v953, 4294901760
          %v1120 = vsub.f32 %v953, %v1119
          %v1121 = vand.u32 %v1120, 4294901760
          %v1122 = vsub.f32 %v1120, %v1121
          %v1123 = vand.u32 %v1122, 4294901760
          %1124 = vmatmul.f32.gmra.mxu0 %v1123
          %v1125 = vpop.f32.mrf.mxu0
          %v1126 = vadd.f32 %v1100, %v1125
          %1127 = vdwg.mxu0
          %1128 = vmatpush.xpose.msra.mxu0 0.0
          %1129 = vmatpush.xpose.msra.mxu0 0.0
          %1130 = vmatpush.xpose.msra.mxu0 0.0
          %1131 = vmatpush.xpose.msra.mxu0 0.0
          %1132 = vmatpush.xpose.msra.mxu0 0.0
          %1133 = vmatpush.xpose.msra.mxu0 0.0
          %1134 = vmatpush.xpose.msra.mxu0 0.0
          %1135 = vmatpush.xpose.msra.mxu0 0.0
          %1136 = vmatpush.xpose.msra.mxu0 0.0
          %1137 = vmatpush.xpose.msra.mxu0 0.0
          %1138 = vmatpush.xpose.msra.mxu0 0.0
          %1139 = vmatpush.xpose.msra.mxu0 0.0
          %1140 = vmatpush.xpose.msra.mxu0 0.0
          %1141 = vmatpush.xpose.msra.mxu0 0.0
          %1142 = vmatpush.xpose.msra.mxu0 0.0
          %v1143 = vand.u32 %v647, 4294901760
          %v1144 = vsub.f32 %v647, %v1143
          %v1145 = vand.u32 %v1144, 4294901760
          %v1146 = vsub.f32 %v1144, %v1145
          %v1147 = vand.u32 %v1146, 4294901760
          %1148 = vmatpush.xpose.msra.mxu0 %v1147
          %v1149 = vand.u32 %v953, 4294901760
          %1150 = vmatmul.f32.gmra.mxu0 %v1149
          %v1151 = vpop.f32.mrf.mxu0
          %v1152 = vadd.f32 %v1126, %v1151
          %1153 = vdwg.mxu0
          %1154 = vmatpush.xpose.msra.mxu0 0.0
          %1155 = vmatpush.xpose.msra.mxu0 0.0
          %1156 = vmatpush.xpose.msra.mxu0 0.0
          %1157 = vmatpush.xpose.msra.mxu0 0.0
          %1158 = vmatpush.xpose.msra.mxu0 0.0
          %1159 = vmatpush.xpose.msra.mxu0 0.0
          %1160 = vmatpush.xpose.msra.mxu0 0.0
          %1161 = vmatpush.xpose.msra.mxu0 0.0
          %1162 = vmatpush.xpose.msra.mxu0 0.0
          %1163 = vmatpush.xpose.msra.mxu0 0.0
          %1164 = vmatpush.xpose.msra.mxu0 0.0
          %1165 = vmatpush.xpose.msra.mxu0 0.0
          %1166 = vmatpush.xpose.msra.mxu0 0.0
          %1167 = vmatpush.xpose.msra.mxu0 0.0
          %1168 = vmatpush.xpose.msra.mxu0 0.0
          %v1169 = vand.u32 %v647, 4294901760
          %v1170 = vsub.f32 %v647, %v1169
          %1171 = vmatpush.xpose.msra.mxu0 %v1170
          %v1172 = vand.u32 %v953, 4294901760
          %v1173 = vsub.f32 %v953, %v1172
          %1174 = vmatmul.f32.gmra.mxu0 %v1173
          %v1175 = vpop.f32.mrf.mxu0
          %v1176 = vadd.f32 %v1152, %v1175
          %1177 = vdwg.mxu0
          %1178 = vmatpush.xpose.msra.mxu0 0.0
          %1179 = vmatpush.xpose.msra.mxu0 0.0
          %1180 = vmatpush.xpose.msra.mxu0 0.0
          %1181 = vmatpush.xpose.msra.mxu0 0.0
          %1182 = vmatpush.xpose.msra.mxu0 0.0
          %1183 = vmatpush.xpose.msra.mxu0 0.0
          %1184 = vmatpush.xpose.msra.mxu0 0.0
          %1185 = vmatpush.xpose.msra.mxu0 0.0
          %1186 = vmatpush.xpose.msra.mxu0 0.0
          %1187 = vmatpush.xpose.msra.mxu0 0.0
          %1188 = vmatpush.xpose.msra.mxu0 0.0
          %1189 = vmatpush.xpose.msra.mxu0 0.0
          %1190 = vmatpush.xpose.msra.mxu0 0.0
          %1191 = vmatpush.xpose.msra.mxu0 0.0
          %1192 = vmatpush.xpose.msra.mxu0 0.0
          %v1193 = vand.u32 %v647, 4294901760
          %1194 = vmatpush.xpose.msra.mxu0 %v1193
          %v1195 = vand.u32 %v953, 4294901760
          %v1196 = vsub.f32 %v953, %v1195
          %v1197 = vand.u32 %v1196, 4294901760
          %1198 = vmatmul.f32.gmra.mxu0 %v1197
          %v1199 = vpop.f32.mrf.mxu0
          %v1200 = vadd.f32 %v1176, %v1199
          %1201 = vdwg.mxu0
          %1202 = vmatpush.xpose.msra.mxu0 0.0
          %1203 = vmatpush.xpose.msra.mxu0 0.0
          %1204 = vmatpush.xpose.msra.mxu0 0.0
          %1205 = vmatpush.xpose.msra.mxu0 0.0
          %1206 = vmatpush.xpose.msra.mxu0 0.0
          %1207 = vmatpush.xpose.msra.mxu0 0.0
          %1208 = vmatpush.xpose.msra.mxu0 0.0
          %1209 = vmatpush.xpose.msra.mxu0 0.0
          %1210 = vmatpush.xpose.msra.mxu0 0.0
          %1211 = vmatpush.xpose.msra.mxu0 0.0
          %1212 = vmatpush.xpose.msra.mxu0 0.0
          %1213 = vmatpush.xpose.msra.mxu0 0.0
          %1214 = vmatpush.xpose.msra.mxu0 0.0
          %1215 = vmatpush.xpose.msra.mxu0 0.0
          %1216 = vmatpush.xpose.msra.mxu0 0.0
          %v1217 = vand.u32 %v647, 4294901760
          %v1218 = vsub.f32 %v647, %v1217
          %v1219 = vand.u32 %v1218, 4294901760
          %1220 = vmatpush.xpose.msra.mxu0 %v1219
          %v1221 = vand.u32 %v953, 4294901760
          %1222 = vmatmul.f32.gmra.mxu0 %v1221
          %v1223 = vpop.f32.mrf.mxu0
          %v1224 = vadd.f32 %v1200, %v1223
          %1225 = vdwg.mxu0
          %1226 = vmatpush.xpose.msra.mxu0 0.0
          %1227 = vmatpush.xpose.msra.mxu0 0.0
          %1228 = vmatpush.xpose.msra.mxu0 0.0
          %1229 = vmatpush.xpose.msra.mxu0 0.0
          %1230 = vmatpush.xpose.msra.mxu0 0.0
          %1231 = vmatpush.xpose.msra.mxu0 0.0
          %1232 = vmatpush.xpose.msra.mxu0 0.0
          %1233 = vmatpush.xpose.msra.mxu0 0.0
          %1234 = vmatpush.xpose.msra.mxu0 0.0
          %1235 = vmatpush.xpose.msra.mxu0 0.0
          %1236 = vmatpush.xpose.msra.mxu0 0.0
          %1237 = vmatpush.xpose.msra.mxu0 0.0
          %1238 = vmatpush.xpose.msra.mxu0 0.0
          %1239 = vmatpush.xpose.msra.mxu0 0.0
          %1240 = vmatpush.xpose.msra.mxu0 0.0
          %v1241 = vand.u32 %v647, 4294901760
          %1242 = vmatpush.xpose.msra.mxu0 %v1241
          %v1243 = vand.u32 %v953, 4294901760
          %1244 = vmatmul.f32.gmra.mxu0 %v1243
          %v1245 = vpop.f32.mrf.mxu0
          %v1246 = vadd.f32 %v1224, %v1245
          %1247 = vdwg.mxu0
          %1249 = vst [vmem:[#allocation1] ss:$4 sm:$0xff] %v650
          %v1250 = vld.sshfl [vmem:[#allocation1] sm:$0xff pattern:$0x73625140]
          %v1251 = vld.sshfl [vmem:[#allocation1 + $0x8] sm:$0xff pattern:$0x73625140]
          %1254 = vmatpush.xpose.msra.mxu0 0.0
          %1255 = vmatpush.xpose.msra.mxu0 0.0
          %1256 = vmatpush.xpose.msra.mxu0 0.0
          %1257 = vmatpush.xpose.msra.mxu0 0.0
          %1258 = vmatpush.xpose.msra.mxu0 0.0
          %1259 = vmatpush.xpose.msra.mxu0 0.0
          %1260 = vmatpush.xpose.msra.mxu0 0.0
          %1261 = vmatpush.xpose.msra.mxu0 0.0
          %1262 = vmatpush.xpose.msra.mxu0 0.0
          %1263 = vmatpush.xpose.msra.mxu0 0.0
          %1264 = vmatpush.xpose.msra.mxu0 0.0
          %1265 = vmatpush.xpose.msra.mxu0 0.0
          %1266 = vmatpush.xpose.msra.mxu0 0.0
          %1267 = vmatpush.xpose.msra.mxu0 0.0
          %1268 = vmatpush.xpose.msra.mxu0 0.0
          %v1269 = vand.u32 %v644, 4294901760
          %1270 = vmatpush.xpose.msra.mxu0 %v1269
          %v1271 = vand.u32 %v1250, 4294901760
          %v1272 = vsub.f32 %v1250, %v1271
          %v1273 = vand.u32 %v1272, 4294901760
          %v1274 = vsub.f32 %v1272, %v1273
          %v1275 = vand.u32 %v1274, 4294901760
          %1276 = vmatmul.f32.gmra.mxu0 %v1275
          %v1277 = vpop.f32.mrf.mxu0
          %v1278 = vadd.f32 0.0, %v1277
          %1279 = vdwg.mxu0
          %1280 = vmatpush.xpose.msra.mxu0 0.0
          %1281 = vmatpush.xpose.msra.mxu0 0.0
          %1282 = vmatpush.xpose.msra.mxu0 0.0
          %1283 = vmatpush.xpose.msra.mxu0 0.0
          %1284 = vmatpush.xpose.msra.mxu0 0.0
          %1285 = vmatpush.xpose.msra.mxu0 0.0
          %1286 = vmatpush.xpose.msra.mxu0 0.0
          %1287 = vmatpush.xpose.msra.mxu0 0.0
          %1288 = vmatpush.xpose.msra.mxu0 0.0
          %1289 = vmatpush.xpose.msra.mxu0 0.0
          %1290 = vmatpush.xpose.msra.mxu0 0.0
          %1291 = vmatpush.xpose.msra.mxu0 0.0
          %1292 = vmatpush.xpose.msra.mxu0 0.0
          %1293 = vmatpush.xpose.msra.mxu0 0.0
          %1294 = vmatpush.xpose.msra.mxu0 0.0
          %v1295 = vand.u32 %v644, 4294901760
          %v1296 = vsub.f32 %v644, %v1295
          %v1297 = vand.u32 %v1296, 4294901760
          %v1298 = vsub.f32 %v1296, %v1297
          %v1299 = vand.u32 %v1298, 4294901760
          %1300 = vmatpush.xpose.msra.mxu0 %v1299
          %v1301 = vand.u32 %v1250, 4294901760
          %1302 = vmatmul.f32.gmra.mxu0 %v1301
          %v1303 = vpop.f32.mrf.mxu0
          %v1304 = vadd.f32 %v1278, %v1303
          %1305 = vdwg.mxu0
          %1306 = vmatpush.xpose.msra.mxu0 0.0
          %1307 = vmatpush.xpose.msra.mxu0 0.0
          %1308 = vmatpush.xpose.msra.mxu0 0.0
          %1309 = vmatpush.xpose.msra.mxu0 0.0
          %1310 = vmatpush.xpose.msra.mxu0 0.0
          %1311 = vmatpush.xpose.msra.mxu0 0.0
          %1312 = vmatpush.xpose.msra.mxu0 0.0
          %1313 = vmatpush.xpose.msra.mxu0 0.0
          %1314 = vmatpush.xpose.msra.mxu0 0.0
          %1315 = vmatpush.xpose.msra.mxu0 0.0
          %1316 = vmatpush.xpose.msra.mxu0 0.0
          %1317 = vmatpush.xpose.msra.mxu0 0.0
          %1318 = vmatpush.xpose.msra.mxu0 0.0
          %1319 = vmatpush.xpose.msra.mxu0 0.0
          %1320 = vmatpush.xpose.msra.mxu0 0.0
          %v1321 = vand.u32 %v644, 4294901760
          %v1322 = vsub.f32 %v644, %v1321
          %1323 = vmatpush.xpose.msra.mxu0 %v1322
          %v1324 = vand.u32 %v1250, 4294901760
          %v1325 = vsub.f32 %v1250, %v1324
          %1326 = vmatmul.f32.gmra.mxu0 %v1325
          %v1327 = vpop.f32.mrf.mxu0
          %v1328 = vadd.f32 %v1304, %v1327
          %1329 = vdwg.mxu0
          %1330 = vmatpush.xpose.msra.mxu0 0.0
          %1331 = vmatpush.xpose.msra.mxu0 0.0
          %1332 = vmatpush.xpose.msra.mxu0 0.0
          %1333 = vmatpush.xpose.msra.mxu0 0.0
          %1334 = vmatpush.xpose.msra.mxu0 0.0
          %1335 = vmatpush.xpose.msra.mxu0 0.0
          %1336 = vmatpush.xpose.msra.mxu0 0.0
          %1337 = vmatpush.xpose.msra.mxu0 0.0
          %1338 = vmatpush.xpose.msra.mxu0 0.0
          %1339 = vmatpush.xpose.msra.mxu0 0.0
          %1340 = vmatpush.xpose.msra.mxu0 0.0
          %1341 = vmatpush.xpose.msra.mxu0 0.0
          %1342 = vmatpush.xpose.msra.mxu0 0.0
          %1343 = vmatpush.xpose.msra.mxu0 0.0
          %1344 = vmatpush.xpose.msra.mxu0 0.0
          %v1345 = vand.u32 %v644, 4294901760
          %1346 = vmatpush.xpose.msra.mxu0 %v1345
          %v1347 = vand.u32 %v1250, 4294901760
          %v1348 = vsub.f32 %v1250, %v1347
          %v1349 = vand.u32 %v1348, 4294901760
          %1350 = vmatmul.f32.gmra.mxu0 %v1349
          %v1351 = vpop.f32.mrf.mxu0
          %v1352 = vadd.f32 %v1328, %v1351
          %1353 = vdwg.mxu0
          %1354 = vmatpush.xpose.msra.mxu0 0.0
          %1355 = vmatpush.xpose.msra.mxu0 0.0
          %1356 = vmatpush.xpose.msra.mxu0 0.0
          %1357 = vmatpush.xpose.msra.mxu0 0.0
          %1358 = vmatpush.xpose.msra.mxu0 0.0
          %1359 = vmatpush.xpose.msra.mxu0 0.0
          %1360 = vmatpush.xpose.msra.mxu0 0.0
          %1361 = vmatpush.xpose.msra.mxu0 0.0
          %1362 = vmatpush.xpose.msra.mxu0 0.0
          %1363 = vmatpush.xpose.msra.mxu0 0.0
          %1364 = vmatpush.xpose.msra.mxu0 0.0
          %1365 = vmatpush.xpose.msra.mxu0 0.0
          %1366 = vmatpush.xpose.msra.mxu0 0.0
          %1367 = vmatpush.xpose.msra.mxu0 0.0
          %1368 = vmatpush.xpose.msra.mxu0 0.0
          %v1369 = vand.u32 %v644, 4294901760
          %v1370 = vsub.f32 %v644, %v1369
          %v1371 = vand.u32 %v1370, 4294901760
          %1372 = vmatpush.xpose.msra.mxu0 %v1371
          %v1373 = vand.u32 %v1250, 4294901760
          %1374 = vmatmul.f32.gmra.mxu0 %v1373
          %v1375 = vpop.f32.mrf.mxu0
          %v1376 = vadd.f32 %v1352, %v1375
          %1377 = vdwg.mxu0
          %1378 = vmatpush.xpose.msra.mxu0 0.0
          %1379 = vmatpush.xpose.msra.mxu0 0.0
          %1380 = vmatpush.xpose.msra.mxu0 0.0
          %1381 = vmatpush.xpose.msra.mxu0 0.0
          %1382 = vmatpush.xpose.msra.mxu0 0.0
          %1383 = vmatpush.xpose.msra.mxu0 0.0
          %1384 = vmatpush.xpose.msra.mxu0 0.0
          %1385 = vmatpush.xpose.msra.mxu0 0.0
          %1386 = vmatpush.xpose.msra.mxu0 0.0
          %1387 = vmatpush.xpose.msra.mxu0 0.0
          %1388 = vmatpush.xpose.msra.mxu0 0.0
          %1389 = vmatpush.xpose.msra.mxu0 0.0
          %1390 = vmatpush.xpose.msra.mxu0 0.0
          %1391 = vmatpush.xpose.msra.mxu0 0.0
          %1392 = vmatpush.xpose.msra.mxu0 0.0
          %v1393 = vand.u32 %v644, 4294901760
          %1394 = vmatpush.xpose.msra.mxu0 %v1393
          %v1395 = vand.u32 %v1250, 4294901760
          %1396 = vmatmul.f32.gmra.mxu0 %v1395
          %v1397 = vpop.f32.mrf.mxu0
          %v1398 = vadd.f32 %v1376, %v1397
          %1399 = vdwg.mxu0
          %1400 = vmatpush.xpose.msra.mxu0 0.0
          %1401 = vmatpush.xpose.msra.mxu0 0.0
          %1402 = vmatpush.xpose.msra.mxu0 0.0
          %1403 = vmatpush.xpose.msra.mxu0 0.0
          %1404 = vmatpush.xpose.msra.mxu0 0.0
          %1405 = vmatpush.xpose.msra.mxu0 0.0
          %1406 = vmatpush.xpose.msra.mxu0 0.0
          %1407 = vmatpush.xpose.msra.mxu0 0.0
          %1408 = vmatpush.xpose.msra.mxu0 0.0
          %1409 = vmatpush.xpose.msra.mxu0 0.0
          %1410 = vmatpush.xpose.msra.mxu0 0.0
          %1411 = vmatpush.xpose.msra.mxu0 0.0
          %1412 = vmatpush.xpose.msra.mxu0 0.0
          %1413 = vmatpush.xpose.msra.mxu0 0.0
          %1414 = vmatpush.xpose.msra.mxu0 0.0
          %v1415 = vand.u32 %v645, 4294901760
          %1416 = vmatpush.xpose.msra.mxu0 %v1415
          %v1417 = vand.u32 %v1251, 4294901760
          %v1418 = vsub.f32 %v1251, %v1417
          %v1419 = vand.u32 %v1418, 4294901760
          %v1420 = vsub.f32 %v1418, %v1419
          %v1421 = vand.u32 %v1420, 4294901760
          %1422 = vmatmul.f32.gmra.mxu0 %v1421
          %v1423 = vpop.f32.mrf.mxu0
          %v1424 = vadd.f32 %v1398, %v1423
          %1425 = vdwg.mxu0
          %1426 = vmatpush.xpose.msra.mxu0 0.0
          %1427 = vmatpush.xpose.msra.mxu0 0.0
          %1428 = vmatpush.xpose.msra.mxu0 0.0
          %1429 = vmatpush.xpose.msra.mxu0 0.0
          %1430 = vmatpush.xpose.msra.mxu0 0.0
          %1431 = vmatpush.xpose.msra.mxu0 0.0
          %1432 = vmatpush.xpose.msra.mxu0 0.0
          %1433 = vmatpush.xpose.msra.mxu0 0.0
          %1434 = vmatpush.xpose.msra.mxu0 0.0
          %1435 = vmatpush.xpose.msra.mxu0 0.0
          %1436 = vmatpush.xpose.msra.mxu0 0.0
          %1437 = vmatpush.xpose.msra.mxu0 0.0
          %1438 = vmatpush.xpose.msra.mxu0 0.0
          %1439 = vmatpush.xpose.msra.mxu0 0.0
          %1440 = vmatpush.xpose.msra.mxu0 0.0
          %v1441 = vand.u32 %v645, 4294901760
          %v1442 = vsub.f32 %v645, %v1441
          %v1443 = vand.u32 %v1442, 4294901760
          %v1444 = vsub.f32 %v1442, %v1443
          %v1445 = vand.u32 %v1444, 4294901760
          %1446 = vmatpush.xpose.msra.mxu0 %v1445
          %v1447 = vand.u32 %v1251, 4294901760
          %1448 = vmatmul.f32.gmra.mxu0 %v1447
          %v1449 = vpop.f32.mrf.mxu0
          %v1450 = vadd.f32 %v1424, %v1449
          %1451 = vdwg.mxu0
          %1452 = vmatpush.xpose.msra.mxu0 0.0
          %1453 = vmatpush.xpose.msra.mxu0 0.0
          %1454 = vmatpush.xpose.msra.mxu0 0.0
          %1455 = vmatpush.xpose.msra.mxu0 0.0
          %1456 = vmatpush.xpose.msra.mxu0 0.0
          %1457 = vmatpush.xpose.msra.mxu0 0.0
          %1458 = vmatpush.xpose.msra.mxu0 0.0
          %1459 = vmatpush.xpose.msra.mxu0 0.0
          %1460 = vmatpush.xpose.msra.mxu0 0.0
          %1461 = vmatpush.xpose.msra.mxu0 0.0
          %1462 = vmatpush.xpose.msra.mxu0 0.0
          %1463 = vmatpush.xpose.msra.mxu0 0.0
          %1464 = vmatpush.xpose.msra.mxu0 0.0
          %1465 = vmatpush.xpose.msra.mxu0 0.0
          %1466 = vmatpush.xpose.msra.mxu0 0.0
          %v1467 = vand.u32 %v645, 4294901760
          %v1468 = vsub.f32 %v645, %v1467
          %1469 = vmatpush.xpose.msra.mxu0 %v1468
          %v1470 = vand.u32 %v1251, 4294901760
          %v1471 = vsub.f32 %v1251, %v1470
          %1472 = vmatmul.f32.gmra.mxu0 %v1471
          %v1473 = vpop.f32.mrf.mxu0
          %v1474 = vadd.f32 %v1450, %v1473
          %1475 = vdwg.mxu0
          %1476 = vmatpush.xpose.msra.mxu0 0.0
          %1477 = vmatpush.xpose.msra.mxu0 0.0
          %1478 = vmatpush.xpose.msra.mxu0 0.0
          %1479 = vmatpush.xpose.msra.mxu0 0.0
          %1480 = vmatpush.xpose.msra.mxu0 0.0
          %1481 = vmatpush.xpose.msra.mxu0 0.0
          %1482 = vmatpush.xpose.msra.mxu0 0.0
          %1483 = vmatpush.xpose.msra.mxu0 0.0
          %1484 = vmatpush.xpose.msra.mxu0 0.0
          %1485 = vmatpush.xpose.msra.mxu0 0.0
          %1486 = vmatpush.xpose.msra.mxu0 0.0
          %1487 = vmatpush.xpose.msra.mxu0 0.0
          %1488 = vmatpush.xpose.msra.mxu0 0.0
          %1489 = vmatpush.xpose.msra.mxu0 0.0
          %1490 = vmatpush.xpose.msra.mxu0 0.0
          %v1491 = vand.u32 %v645, 4294901760
          %1492 = vmatpush.xpose.msra.mxu0 %v1491
          %v1493 = vand.u32 %v1251, 4294901760
          %v1494 = vsub.f32 %v1251, %v1493
          %v1495 = vand.u32 %v1494, 4294901760
          %1496 = vmatmul.f32.gmra.mxu0 %v1495
          %v1497 = vpop.f32.mrf.mxu0
          %v1498 = vadd.f32 %v1474, %v1497
          %1499 = vdwg.mxu0
          %1500 = vmatpush.xpose.msra.mxu0 0.0
          %1501 = vmatpush.xpose.msra.mxu0 0.0
          %1502 = vmatpush.xpose.msra.mxu0 0.0
          %1503 = vmatpush.xpose.msra.mxu0 0.0
          %1504 = vmatpush.xpose.msra.mxu0 0.0
          %1505 = vmatpush.xpose.msra.mxu0 0.0
          %1506 = vmatpush.xpose.msra.mxu0 0.0
          %1507 = vmatpush.xpose.msra.mxu0 0.0
          %1508 = vmatpush.xpose.msra.mxu0 0.0
          %1509 = vmatpush.xpose.msra.mxu0 0.0
          %1510 = vmatpush.xpose.msra.mxu0 0.0
          %1511 = vmatpush.xpose.msra.mxu0 0.0
          %1512 = vmatpush.xpose.msra.mxu0 0.0
          %1513 = vmatpush.xpose.msra.mxu0 0.0
          %1514 = vmatpush.xpose.msra.mxu0 0.0
          %v1515 = vand.u32 %v645, 4294901760
          %v1516 = vsub.f32 %v645, %v1515
          %v1517 = vand.u32 %v1516, 4294901760
          %1518 = vmatpush.xpose.msra.mxu0 %v1517
          %v1519 = vand.u32 %v1251, 4294901760
          %1520 = vmatmul.f32.gmra.mxu0 %v1519
          %v1521 = vpop.f32.mrf.mxu0
          %v1522 = vadd.f32 %v1498, %v1521
          %1523 = vdwg.mxu0
          %1524 = vmatpush.xpose.msra.mxu0 0.0
          %1525 = vmatpush.xpose.msra.mxu0 0.0
          %1526 = vmatpush.xpose.msra.mxu0 0.0
          %1527 = vmatpush.xpose.msra.mxu0 0.0
          %1528 = vmatpush.xpose.msra.mxu0 0.0
          %1529 = vmatpush.xpose.msra.mxu0 0.0
          %1530 = vmatpush.xpose.msra.mxu0 0.0
          %1531 = vmatpush.xpose.msra.mxu0 0.0
          %1532 = vmatpush.xpose.msra.mxu0 0.0
          %1533 = vmatpush.xpose.msra.mxu0 0.0
          %1534 = vmatpush.xpose.msra.mxu0 0.0
          %1535 = vmatpush.xpose.msra.mxu0 0.0
          %1536 = vmatpush.xpose.msra.mxu0 0.0
          %1537 = vmatpush.xpose.msra.mxu0 0.0
          %1538 = vmatpush.xpose.msra.mxu0 0.0
          %v1539 = vand.u32 %v645, 4294901760
          %1540 = vmatpush.xpose.msra.mxu0 %v1539
          %v1541 = vand.u32 %v1251, 4294901760
          %1542 = vmatmul.f32.gmra.mxu0 %v1541
          %v1543 = vpop.f32.mrf.mxu0
          %v1544 = vadd.f32 %v1522, %v1543
          %1545 = vdwg.mxu0
          %1547 = vst [vmem:[#allocation1] ss:$4 sm:$0xff] %v651
          %v1548 = vld.sshfl [vmem:[#allocation1] sm:$0xff pattern:$0x73625140]
          %v1549 = vld.sshfl [vmem:[#allocation1 + $0x8] sm:$0xff pattern:$0x73625140]
          %1552 = vmatpush.xpose.msra.mxu0 0.0
          %1553 = vmatpush.xpose.msra.mxu0 0.0
          %1554 = vmatpush.xpose.msra.mxu0 0.0
          %1555 = vmatpush.xpose.msra.mxu0 0.0
          %1556 = vmatpush.xpose.msra.mxu0 0.0
          %1557 = vmatpush.xpose.msra.mxu0 0.0
          %1558 = vmatpush.xpose.msra.mxu0 0.0
          %1559 = vmatpush.xpose.msra.mxu0 0.0
          %1560 = vmatpush.xpose.msra.mxu0 0.0
          %1561 = vmatpush.xpose.msra.mxu0 0.0
          %1562 = vmatpush.xpose.msra.mxu0 0.0
          %1563 = vmatpush.xpose.msra.mxu0 0.0
          %1564 = vmatpush.xpose.msra.mxu0 0.0
          %1565 = vmatpush.xpose.msra.mxu0 0.0
          %1566 = vmatpush.xpose.msra.mxu0 0.0
          %v1567 = vand.u32 %v646, 4294901760
          %1568 = vmatpush.xpose.msra.mxu0 %v1567
          %v1569 = vand.u32 %v1548, 4294901760
          %v1570 = vsub.f32 %v1548, %v1569
          %v1571 = vand.u32 %v1570, 4294901760
          %v1572 = vsub.f32 %v1570, %v1571
          %v1573 = vand.u32 %v1572, 4294901760
          %1574 = vmatmul.f32.gmra.mxu0 %v1573
          %v1575 = vpop.f32.mrf.mxu0
          %v1576 = vadd.f32 0.0, %v1575
          %1577 = vdwg.mxu0
          %1578 = vmatpush.xpose.msra.mxu0 0.0
          %1579 = vmatpush.xpose.msra.mxu0 0.0
          %1580 = vmatpush.xpose.msra.mxu0 0.0
          %1581 = vmatpush.xpose.msra.mxu0 0.0
          %1582 = vmatpush.xpose.msra.mxu0 0.0
          %1583 = vmatpush.xpose.msra.mxu0 0.0
          %1584 = vmatpush.xpose.msra.mxu0 0.0
          %1585 = vmatpush.xpose.msra.mxu0 0.0
          %1586 = vmatpush.xpose.msra.mxu0 0.0
          %1587 = vmatpush.xpose.msra.mxu0 0.0
          %1588 = vmatpush.xpose.msra.mxu0 0.0
          %1589 = vmatpush.xpose.msra.mxu0 0.0
          %1590 = vmatpush.xpose.msra.mxu0 0.0
          %1591 = vmatpush.xpose.msra.mxu0 0.0
          %1592 = vmatpush.xpose.msra.mxu0 0.0
          %v1593 = vand.u32 %v646, 4294901760
          %v1594 = vsub.f32 %v646, %v1593
          %v1595 = vand.u32 %v1594, 4294901760
          %v1596 = vsub.f32 %v1594, %v1595
          %v1597 = vand.u32 %v1596, 4294901760
          %1598 = vmatpush.xpose.msra.mxu0 %v1597
          %v1599 = vand.u32 %v1548, 4294901760
          %1600 = vmatmul.f32.gmra.mxu0 %v1599
          %v1601 = vpop.f32.mrf.mxu0
          %v1602 = vadd.f32 %v1576, %v1601
          %1603 = vdwg.mxu0
          %1604 = vmatpush.xpose.msra.mxu0 0.0
          %1605 = vmatpush.xpose.msra.mxu0 0.0
          %1606 = vmatpush.xpose.msra.mxu0 0.0
          %1607 = vmatpush.xpose.msra.mxu0 0.0
          %1608 = vmatpush.xpose.msra.mxu0 0.0
          %1609 = vmatpush.xpose.msra.mxu0 0.0
          %1610 = vmatpush.xpose.msra.mxu0 0.0
          %1611 = vmatpush.xpose.msra.mxu0 0.0
          %1612 = vmatpush.xpose.msra.mxu0 0.0
          %1613 = vmatpush.xpose.msra.mxu0 0.0
          %1614 = vmatpush.xpose.msra.mxu0 0.0
          %1615 = vmatpush.xpose.msra.mxu0 0.0
          %1616 = vmatpush.xpose.msra.mxu0 0.0
          %1617 = vmatpush.xpose.msra.mxu0 0.0
          %1618 = vmatpush.xpose.msra.mxu0 0.0
          %v1619 = vand.u32 %v646, 4294901760
          %v1620 = vsub.f32 %v646, %v1619
          %1621 = vmatpush.xpose.msra.mxu0 %v1620
          %v1622 = vand.u32 %v1548, 4294901760
          %v1623 = vsub.f32 %v1548, %v1622
          %1624 = vmatmul.f32.gmra.mxu0 %v1623
          %v1625 = vpop.f32.mrf.mxu0
          %v1626 = vadd.f32 %v1602, %v1625
          %1627 = vdwg.mxu0
          %1628 = vmatpush.xpose.msra.mxu0 0.0
          %1629 = vmatpush.xpose.msra.mxu0 0.0
          %1630 = vmatpush.xpose.msra.mxu0 0.0
          %1631 = vmatpush.xpose.msra.mxu0 0.0
          %1632 = vmatpush.xpose.msra.mxu0 0.0
          %1633 = vmatpush.xpose.msra.mxu0 0.0
          %1634 = vmatpush.xpose.msra.mxu0 0.0
          %1635 = vmatpush.xpose.msra.mxu0 0.0
          %1636 = vmatpush.xpose.msra.mxu0 0.0
          %1637 = vmatpush.xpose.msra.mxu0 0.0
          %1638 = vmatpush.xpose.msra.mxu0 0.0
          %1639 = vmatpush.xpose.msra.mxu0 0.0
          %1640 = vmatpush.xpose.msra.mxu0 0.0
          %1641 = vmatpush.xpose.msra.mxu0 0.0
          %1642 = vmatpush.xpose.msra.mxu0 0.0
          %v1643 = vand.u32 %v646, 4294901760
          %1644 = vmatpush.xpose.msra.mxu0 %v1643
          %v1645 = vand.u32 %v1548, 4294901760
          %v1646 = vsub.f32 %v1548, %v1645
          %v1647 = vand.u32 %v1646, 4294901760
          %1648 = vmatmul.f32.gmra.mxu0 %v1647
          %v1649 = vpop.f32.mrf.mxu0
          %v1650 = vadd.f32 %v1626, %v1649
          %1651 = vdwg.mxu0
          %1652 = vmatpush.xpose.msra.mxu0 0.0
          %1653 = vmatpush.xpose.msra.mxu0 0.0
          %1654 = vmatpush.xpose.msra.mxu0 0.0
          %1655 = vmatpush.xpose.msra.mxu0 0.0
          %1656 = vmatpush.xpose.msra.mxu0 0.0
          %1657 = vmatpush.xpose.msra.mxu0 0.0
          %1658 = vmatpush.xpose.msra.mxu0 0.0
          %1659 = vmatpush.xpose.msra.mxu0 0.0
          %1660 = vmatpush.xpose.msra.mxu0 0.0
          %1661 = vmatpush.xpose.msra.mxu0 0.0
          %1662 = vmatpush.xpose.msra.mxu0 0.0
          %1663 = vmatpush.xpose.msra.mxu0 0.0
          %1664 = vmatpush.xpose.msra.mxu0 0.0
          %1665 = vmatpush.xpose.msra.mxu0 0.0
          %1666 = vmatpush.xpose.msra.mxu0 0.0
          %v1667 = vand.u32 %v646, 4294901760
          %v1668 = vsub.f32 %v646, %v1667
          %v1669 = vand.u32 %v1668, 4294901760
          %1670 = vmatpush.xpose.msra.mxu0 %v1669
          %v1671 = vand.u32 %v1548, 4294901760
          %1672 = vmatmul.f32.gmra.mxu0 %v1671
          %v1673 = vpop.f32.mrf.mxu0
          %v1674 = vadd.f32 %v1650, %v1673
          %1675 = vdwg.mxu0
          %1676 = vmatpush.xpose.msra.mxu0 0.0
          %1677 = vmatpush.xpose.msra.mxu0 0.0
          %1678 = vmatpush.xpose.msra.mxu0 0.0
          %1679 = vmatpush.xpose.msra.mxu0 0.0
          %1680 = vmatpush.xpose.msra.mxu0 0.0
          %1681 = vmatpush.xpose.msra.mxu0 0.0
          %1682 = vmatpush.xpose.msra.mxu0 0.0
          %1683 = vmatpush.xpose.msra.mxu0 0.0
          %1684 = vmatpush.xpose.msra.mxu0 0.0
          %1685 = vmatpush.xpose.msra.mxu0 0.0
          %1686 = vmatpush.xpose.msra.mxu0 0.0
          %1687 = vmatpush.xpose.msra.mxu0 0.0
          %1688 = vmatpush.xpose.msra.mxu0 0.0
          %1689 = vmatpush.xpose.msra.mxu0 0.0
          %1690 = vmatpush.xpose.msra.mxu0 0.0
          %v1691 = vand.u32 %v646, 4294901760
          %1692 = vmatpush.xpose.msra.mxu0 %v1691
          %v1693 = vand.u32 %v1548, 4294901760
          %1694 = vmatmul.f32.gmra.mxu0 %v1693
          %v1695 = vpop.f32.mrf.mxu0
          %v1696 = vadd.f32 %v1674, %v1695
          %1697 = vdwg.mxu0
          %1698 = vmatpush.xpose.msra.mxu0 0.0
          %1699 = vmatpush.xpose.msra.mxu0 0.0
          %1700 = vmatpush.xpose.msra.mxu0 0.0
          %1701 = vmatpush.xpose.msra.mxu0 0.0
          %1702 = vmatpush.xpose.msra.mxu0 0.0
          %1703 = vmatpush.xpose.msra.mxu0 0.0
          %1704 = vmatpush.xpose.msra.mxu0 0.0
          %1705 = vmatpush.xpose.msra.mxu0 0.0
          %1706 = vmatpush.xpose.msra.mxu0 0.0
          %1707 = vmatpush.xpose.msra.mxu0 0.0
          %1708 = vmatpush.xpose.msra.mxu0 0.0
          %1709 = vmatpush.xpose.msra.mxu0 0.0
          %1710 = vmatpush.xpose.msra.mxu0 0.0
          %1711 = vmatpush.xpose.msra.mxu0 0.0
          %1712 = vmatpush.xpose.msra.mxu0 0.0
          %v1713 = vand.u32 %v647, 4294901760
          %1714 = vmatpush.xpose.msra.mxu0 %v1713
          %v1715 = vand.u32 %v1549, 4294901760
          %v1716 = vsub.f32 %v1549, %v1715
          %v1717 = vand.u32 %v1716, 4294901760
          %v1718 = vsub.f32 %v1716, %v1717
          %v1719 = vand.u32 %v1718, 4294901760
          %1720 = vmatmul.f32.gmra.mxu0 %v1719
          %v1721 = vpop.f32.mrf.mxu0
          %v1722 = vadd.f32 %v1696, %v1721
          %1723 = vdwg.mxu0
          %1724 = vmatpush.xpose.msra.mxu0 0.0
          %1725 = vmatpush.xpose.msra.mxu0 0.0
          %1726 = vmatpush.xpose.msra.mxu0 0.0
          %1727 = vmatpush.xpose.msra.mxu0 0.0
          %1728 = vmatpush.xpose.msra.mxu0 0.0
          %1729 = vmatpush.xpose.msra.mxu0 0.0
          %1730 = vmatpush.xpose.msra.mxu0 0.0
          %1731 = vmatpush.xpose.msra.mxu0 0.0
          %1732 = vmatpush.xpose.msra.mxu0 0.0
          %1733 = vmatpush.xpose.msra.mxu0 0.0
          %1734 = vmatpush.xpose.msra.mxu0 0.0
          %1735 = vmatpush.xpose.msra.mxu0 0.0
          %1736 = vmatpush.xpose.msra.mxu0 0.0
          %1737 = vmatpush.xpose.msra.mxu0 0.0
          %1738 = vmatpush.xpose.msra.mxu0 0.0
          %v1739 = vand.u32 %v647, 4294901760
          %v1740 = vsub.f32 %v647, %v1739
          %v1741 = vand.u32 %v1740, 4294901760
          %v1742 = vsub.f32 %v1740, %v1741
          %v1743 = vand.u32 %v1742, 4294901760
          %1744 = vmatpush.xpose.msra.mxu0 %v1743
          %v1745 = vand.u32 %v1549, 4294901760
          %1746 = vmatmul.f32.gmra.mxu0 %v1745
          %v1747 = vpop.f32.mrf.mxu0
          %v1748 = vadd.f32 %v1722, %v1747
          %1749 = vdwg.mxu0
          %1750 = vmatpush.xpose.msra.mxu0 0.0
          %1751 = vmatpush.xpose.msra.mxu0 0.0
          %1752 = vmatpush.xpose.msra.mxu0 0.0
          %1753 = vmatpush.xpose.msra.mxu0 0.0
          %1754 = vmatpush.xpose.msra.mxu0 0.0
          %1755 = vmatpush.xpose.msra.mxu0 0.0
          %1756 = vmatpush.xpose.msra.mxu0 0.0
          %1757 = vmatpush.xpose.msra.mxu0 0.0
          %1758 = vmatpush.xpose.msra.mxu0 0.0
          %1759 = vmatpush.xpose.msra.mxu0 0.0
          %1760 = vmatpush.xpose.msra.mxu0 0.0
          %1761 = vmatpush.xpose.msra.mxu0 0.0
          %1762 = vmatpush.xpose.msra.mxu0 0.0
          %1763 = vmatpush.xpose.msra.mxu0 0.0
          %1764 = vmatpush.xpose.msra.mxu0 0.0
          %v1765 = vand.u32 %v647, 4294901760
          %v1766 = vsub.f32 %v647, %v1765
          %1767 = vmatpush.xpose.msra.mxu0 %v1766
          %v1768 = vand.u32 %v1549, 4294901760
          %v1769 = vsub.f32 %v1549, %v1768
          %1770 = vmatmul.f32.gmra.mxu0 %v1769
          %v1771 = vpop.f32.mrf.mxu0
          %v1772 = vadd.f32 %v1748, %v1771
          %1773 = vdwg.mxu0
          %1774 = vmatpush.xpose.msra.mxu0 0.0
          %1775 = vmatpush.xpose.msra.mxu0 0.0
          %1776 = vmatpush.xpose.msra.mxu0 0.0
          %1777 = vmatpush.xpose.msra.mxu0 0.0
          %1778 = vmatpush.xpose.msra.mxu0 0.0
          %1779 = vmatpush.xpose.msra.mxu0 0.0
          %1780 = vmatpush.xpose.msra.mxu0 0.0
          %1781 = vmatpush.xpose.msra.mxu0 0.0
          %1782 = vmatpush.xpose.msra.mxu0 0.0
          %1783 = vmatpush.xpose.msra.mxu0 0.0
          %1784 = vmatpush.xpose.msra.mxu0 0.0
          %1785 = vmatpush.xpose.msra.mxu0 0.0
          %1786 = vmatpush.xpose.msra.mxu0 0.0
          %1787 = vmatpush.xpose.msra.mxu0 0.0
          %1788 = vmatpush.xpose.msra.mxu0 0.0
          %v1789 = vand.u32 %v647, 4294901760
          %1790 = vmatpush.xpose.msra.mxu0 %v1789
          %v1791 = vand.u32 %v1549, 4294901760
          %v1792 = vsub.f32 %v1549, %v1791
          %v1793 = vand.u32 %v1792, 4294901760
          %1794 = vmatmul.f32.gmra.mxu0 %v1793
          %v1795 = vpop.f32.mrf.mxu0
          %v1796 = vadd.f32 %v1772, %v1795
          %1797 = vdwg.mxu0
          %1798 = vmatpush.xpose.msra.mxu0 0.0
          %1799 = vmatpush.xpose.msra.mxu0 0.0
          %1800 = vmatpush.xpose.msra.mxu0 0.0
          %1801 = vmatpush.xpose.msra.mxu0 0.0
          %1802 = vmatpush.xpose.msra.mxu0 0.0
          %1803 = vmatpush.xpose.msra.mxu0 0.0
          %1804 = vmatpush.xpose.msra.mxu0 0.0
          %1805 = vmatpush.xpose.msra.mxu0 0.0
          %1806 = vmatpush.xpose.msra.mxu0 0.0
          %1807 = vmatpush.xpose.msra.mxu0 0.0
          %1808 = vmatpush.xpose.msra.mxu0 0.0
          %1809 = vmatpush.xpose.msra.mxu0 0.0
          %1810 = vmatpush.xpose.msra.mxu0 0.0
          %1811 = vmatpush.xpose.msra.mxu0 0.0
          %1812 = vmatpush.xpose.msra.mxu0 0.0
          %v1813 = vand.u32 %v647, 4294901760
          %v1814 = vsub.f32 %v647, %v1813
          %v1815 = vand.u32 %v1814, 4294901760
          %1816 = vmatpush.xpose.msra.mxu0 %v1815
          %v1817 = vand.u32 %v1549, 4294901760
          %1818 = vmatmul.f32.gmra.mxu0 %v1817
          %v1819 = vpop.f32.mrf.mxu0
          %v1820 = vadd.f32 %v1796, %v1819
          %1821 = vdwg.mxu0
          %1822 = vmatpush.xpose.msra.mxu0 0.0
          %1823 = vmatpush.xpose.msra.mxu0 0.0
          %1824 = vmatpush.xpose.msra.mxu0 0.0
          %1825 = vmatpush.xpose.msra.mxu0 0.0
          %1826 = vmatpush.xpose.msra.mxu0 0.0
          %1827 = vmatpush.xpose.msra.mxu0 0.0
          %1828 = vmatpush.xpose.msra.mxu0 0.0
          %1829 = vmatpush.xpose.msra.mxu0 0.0
          %1830 = vmatpush.xpose.msra.mxu0 0.0
          %1831 = vmatpush.xpose.msra.mxu0 0.0
          %1832 = vmatpush.xpose.msra.mxu0 0.0
          %1833 = vmatpush.xpose.msra.mxu0 0.0
          %1834 = vmatpush.xpose.msra.mxu0 0.0
          %1835 = vmatpush.xpose.msra.mxu0 0.0
          %1836 = vmatpush.xpose.msra.mxu0 0.0
          %v1837 = vand.u32 %v647, 4294901760
          %1838 = vmatpush.xpose.msra.mxu0 %v1837
          %v1839 = vand.u32 %v1549, 4294901760
          %1840 = vmatmul.f32.gmra.mxu0 %v1839
          %v1841 = vpop.f32.mrf.mxu0
          %v1842 = vadd.f32 %v1820, %v1841
          %1843 = vdwg.mxu0
          %v1844 = vmul.f32 %v610, %v618
          %v1846 = vrot.slane %v1844, 1
          %v1847 = vperm.slane %v1844, 0
          %v1848 = vperm.slane %v1846, 0
          %v1851 = vmul.f32 %v948, %v1847
          %v1852 = vmul.f32 %v1246, %v1848
          %v1853 = vld [vmem:[%s6] sm:$0x3]
          %v1854 = vld [vmem:[%s6 + $0x2] sm:$0x3]
          %v1855 = vmul.f32 %v1853, %v1847
          %v1856 = vmul.f32 %v1854, %v1848
          %v1857 = vsub.f32 %v1851, %v1855
          %v1858 = vsub.f32 %v1852, %v1856
          %v1859 = vand.u32 2147483647, %v1857
          %v1860 = vand.u32 2147483647, %v1858
          %vm1861 = vcmask 58368
          %v1862 = vsel %vm1861, %v1859, 0.0
          %v1863 = vsel %vm1861, %v1860, 0.0
          %v1864 = vadd.f32 %v1862, %v1863
          %1865 = vadd.xlane.f32.xlu0 %v1864
          %v1866 = vpop.xlane.xlu0 %1865
          %v1867 = vrot.slane %v1866, 4
          %v1868 = vadd.f32 %v1866, %v1867
          %v1869 = vrot.slane %v1868, 2
          %v1870 = vadd.f32 %v1868, %v1869
          %v1871 = vrot.slane %v1870, 1
          %v1872 = vadd.f32 %v1870, %v1871
          %s1873 = vtos %v1872
          %v1874 = vmul.f32 %v1544, %v1847
          %v1875 = vmul.f32 %v1842, %v1848
          %v1876 = vld [vmem:[#allocation16] sm:$0x3]
          %v1877 = vld [vmem:[#allocation16 + $0x2] sm:$0x3]
          %v1878 = vmul.f32 %v1876, %v1847
          %v1879 = vmul.f32 %v1877, %v1848
          %v1880 = vsub.f32 %v1874, %v1878
          %v1881 = vsub.f32 %v1875, %v1879
          %v1882 = vand.u32 2147483647, %v1880
          %v1883 = vand.u32 2147483647, %v1881
          %v1884 = vsel %vm1861, %v1882, 0.0
          %v1885 = vsel %vm1861, %v1883, 0.0
          %v1886 = vadd.f32 %v1884, %v1885
          %1887 = vadd.xlane.f32.xlu0 %v1886
          %v1888 = vpop.xlane.xlu0 %1887
          %v1889 = vrot.slane %v1888, 4
          %v1890 = vadd.f32 %v1888, %v1889
          %v1891 = vrot.slane %v1890, 2
          %v1892 = vadd.f32 %v1890, %v1891
          %v1893 = vrot.slane %v1892, 1
          %v1894 = vadd.f32 %v1892, %v1893
          %s1895 = vtos %v1894
          %vm1896 = vcmp.eq.s32.totalorder %v620, 2
          %vm1897 = vcmp.eq.s32.totalorder %v620, 3
          %v1898 = vstv %s1895
          %v1899 = vsel %vm1897, %v1898, 0.0
          %v1900 = vstv %s1873
          %v1901 = vsel %vm1896, %v1900, %v1899
          %1902 = vst [vmem:[#allocation4] sm:$0xff] %v1901
        $region92: #{tpu_custom_call.1} parent=51 // pred_fallthru
          _
        %p1903 = scmp.eq.s32.totalorder %s37, 1
        // Predicated region
        $region93: #{tpu_custom_call.1} parent=51 // pred_check
          %p1904 = pneg %p1903
        $region94: #{tpu_custom_call.1} parent=51 // pred_check_branch
          %1906 = sbr.rel (%p1904) target = $region96
        $region95: #{tpu_custom_call.1} parent=51 // pred_region
          %v1907 = vld [vmem:[#allocation2] sm:$0xff]
          %v1908 = vld [vmem:[#allocation2 + $0x8] sm:$0xff]
          %v1909 = vadd.f32 %v1907, %v1908
          %1910 = vadd.xlane.f32.xlu0 %v1909
          %v1911 = vpop.xlane.xlu0 %1910
          %v1912 = vrot.slane %v1911, 4
          %v1913 = vadd.f32 %v1911, %v1912
          %v1914 = vrot.slane %v1913, 2
          %v1915 = vadd.f32 %v1913, %v1914
          %v1916 = vrot.slane %v1915, 1
          %v1917 = vadd.f32 %v1915, %v1916
          %s1918 = vtos %v1917
          %v1919 = vld [vmem:[#allocation3] sm:$0xff]
          %v1920 = vld [vmem:[#allocation3 + $0x8] sm:$0xff]
          %v1921 = vadd.f32 %v1919, %v1920
          %1922 = vadd.xlane.f32.xlu0 %v1921
          %v1923 = vpop.xlane.xlu0 %1922
          %v1924 = vrot.slane %v1923, 4
          %v1925 = vadd.f32 %v1923, %v1924
          %v1926 = vrot.slane %v1925, 2
          %v1927 = vadd.f32 %v1925, %v1926
          %v1928 = vrot.slane %v1927, 1
          %v1929 = vadd.f32 %v1927, %v1928
          %s1930 = vtos %v1929
          %v1931 = vlaneseq
          %v1932 = vand.u32 %v1931, 127
          %vm1933 = vcmp.eq.s32.totalorder %v1932, 0
          %vm1934 = vcmp.eq.s32.totalorder %v1932, 1
          %v1935 = vstv %s1930
          %v1936 = vsel %vm1934, %v1935, 0.0
          %v1937 = vstv %s1918
          %v1938 = vsel %vm1933, %v1937, %v1936
          %v1939 = vld [vmem:[#allocation4] sm:$0xff]
          %v1940 = vadd.f32 %v1938, %v1939
          %1941 = vst [vmem:[%s509] sm:$0xff] %v1940
        $region96: #{tpu_custom_call.1} parent=51 // pred_fallthru
          _
        %s1942 = sand.u32 %s244, 1
        %s1943 = scalar_lea.sflag [#allocation7], %s1942
        %s1944 = sand.u32 %s244, 1
        %s1945 = smul.addr %s1944, 8
        %s1946 = scalar_lea.vmem [#allocation17], %s1945
        // Predicated region
        $region97: #{tpu_custom_call.1} parent=51 // pred_check
          %p1947 = pneg %p254
        $region98: #{tpu_custom_call.1} parent=51 // pred_check_branch
          %1949 = sbr.rel (%p1947) target = $region100
        $region99: #{tpu_custom_call.1} parent=51 // pred_region
          %1951 = vsyncadd %s1943, 0
          %s1952 = smul.addr %s36, 8
          %s1953 = scalar_lea.hbm %s8, %s1952
          %s1955 = sshll.u32 %s1946, 4
          %s1956 = int_to_ptr.vmem [resolvable:$true] %s1955
          %s1957 = sshll.u32 %s1953, 4
          %s1958 = int_to_ptr.hbm [resolvable:$true] %s1957
          %1960 = dma.vmem_to_hbm [thread:$0]  %s1956, 128, %s1958, %s1943
        $region100: #{tpu_custom_call.1} parent=51 // pred_fallthru
          _
      $region52: #{tpu_custom_call.1} parent=5 // pred_fallthru
        _
      %p1961 = scmp.le.s32.totalorder 2, %s27
      // Predicated region
      $region101: #{tpu_custom_call.1} parent=5 // pred_check
        %p1962 = pneg %p1961
      $region102: #{tpu_custom_call.1} parent=5 // pred_check_branch
        %1964 = sbr.rel (%p1962) target = $region104
      $region103: #{tpu_custom_call.1} parent=5 // pred_region
        %s1965 = ssub.s32 %s27, 2
        // Predicated region
        $region105: #{tpu_custom_call.1} parent=103 // pred_check
          %p1966 = pneg %p260
        $region106: #{tpu_custom_call.1} parent=103 // pred_check_branch
          %1968 = sbr.rel (%p1966) target = $region108
        $region107: #{tpu_custom_call.1} parent=103 // pred_region
          %s1969 = sand.u32 %s245, 1
          %s1970 = scalar_lea.sflag [#allocation7], %s1969
          %s1971 = sand.u32 %s245, 1
          %s1972 = smul.addr %s1971, 8
          %s1973 = scalar_lea.vmem [#allocation17], %s1972
          %1975 = dma.done %s1970, 128
        $region108: #{tpu_custom_call.1} parent=103 // pred_fallthru
          _
      $region104: #{tpu_custom_call.1} parent=5 // pred_fallthru
        _
    $region6: #{tpu_custom_call.1} parent=1 // loop_footer
      %s31 = sadd.s32 1, %s27
    $region7: #{tpu_custom_call.1} parent=1 // loop_footer_branch
      %26 = sbr.rel target = $region3
    $region8: #{tpu_custom_call.1} parent=1 // loop_exit
      _
    %1976 = vsyncpa [#allocation6], 1
    %s1977 = scalar_lea.sflag [#allocation6], 1
    %1978 = vsyncpa %s1977, 1
    %1979 = vsyncpa [#allocation9], 1
    %s1980 = scalar_lea.sflag [#allocation9], 1
    %1981 = vsyncpa %s1980, 1
    %1982 = vsyncpa [#allocation12], 1
    %s1983 = scalar_lea.sflag [#allocation12], 1
    %1984 = vsyncpa %s1983, 1
    %1985 = vsyncpa [#allocation15], 1
    %1986 = vsyncpa [#allocation7], 1
    %s1987 = scalar_lea.sflag [#allocation7], 1
    %1988 = vsyncpa %s1987, 1

</llo_original>
